<compile_context>
chip_gen: v5e
topology: v5e:2x2
jax: 0.10.0
libtpu: 0.0.40
codegen_flags: <defaults>
</compile_context>

<pallas_src>
import functools
import math

import jax
import jax.numpy as jnp
import numpy as np
from jax.experimental import pallas as pl
from jax.experimental.pallas import tpu as pltpu

# -----------------------------------------------------------------------------
# Hyper-parameters (small synthetic sizes consistent with the module __init__)
# -----------------------------------------------------------------------------
IN_CHANNELS = 16            # in_channels (must be even)
HALF = IN_CHANNELS // 2     # half_channels = 8
EMB = 16                    # phoneme_embedding_dim (WN hidden channels)
KERNEL_SIZE = 5             # WN kernel size
N_RESBLOCKS = 2             # WN layers (dilation_rate = 1 -> dilation 1 everywhere)
N_ENC_LAYERS = 2            # pre_transformer n_layers
N_HEADS = 2                 # pre_transformer n_heads
HEAD_DIM = HALF // N_HEADS
FFN_KERNEL = 3              # pre_transformer FFN kernel size
LN_EPS = 1e-5

B = 2
T = 16

# -----------------------------------------------------------------------------
# Parameter slab layout (single packed f32 array, sliced statically in-kernel)
# -----------------------------------------------------------------------------
SLAB_COLS = 128   # lane-dense slab width


def _param_entries():
    e = []
    for l in range(N_ENC_LAYERS):
        e += [(f"enc{l}_qkv_w", (HALF, 3 * HALF)), (f"enc{l}_qkv_b", (1, 3 * HALF)),
              (f"enc{l}_o_w", (HALF, HALF)), (f"enc{l}_o_b", (1, HALF)),
              (f"enc{l}_ln1_g", (1, HALF)), (f"enc{l}_ln1_b", (1, HALF)),
              (f"enc{l}_ln2_g", (1, HALF)), (f"enc{l}_ln2_b", (1, HALF)),
              (f"enc{l}_ffn1_w", (FFN_KERNEL * HALF, HALF)), (f"enc{l}_ffn1_b", (1, HALF)),
              (f"enc{l}_ffn2_w", (FFN_KERNEL * HALF, HALF)), (f"enc{l}_ffn2_b", (1, HALF))]
    e += [("pre_w", (HALF, EMB)), ("pre_b", (1, EMB))]
    for i in range(N_RESBLOCKS):
        e += [(f"wn{i}_in_w", (KERNEL_SIZE * EMB, 2 * EMB)), (f"wn{i}_in_b", (1, 2 * EMB)),
              (f"wn{i}_rs_w", (EMB, 2 * EMB)), (f"wn{i}_rs_b", (1, 2 * EMB))]
    e += [("post_w", (EMB, HALF)), ("post_b", (1, HALF))]
    return e


def _build_layout():
    layout = {}
    row = 0
    for name, (r, c) in _param_entries():
        assert c <= SLAB_COLS
        layout[name] = (row, r, c)
        row += ((r + 7) // 8) * 8          # keep every entry sublane-aligned
    return layout, row


PARAM_LAYOUT, SLAB_ROWS = _build_layout()


def pack_params(params):
    """One-time packing of all parameters into a single (SLAB_ROWS, 128) slab.

    Done host-side with numpy (no per-call XLA scatter chain).  The softmax
    1/sqrt(head_dim) scale is folded into the Q projection weights/biases.
    """
    p = {k: np.asarray(v, np.float32) for k, v in params.items()}
    scale = 1.0 / math.sqrt(HEAD_DIM)
    ent = {}
    for l in range(N_ENC_LAYERS):
        wq = p["attn_w"][l, 0] * scale
        bq = p["attn_b"][l, 0] * scale
        ent[f"enc{l}_qkv_w"] = np.concatenate([wq, p["attn_w"][l, 1], p["attn_w"][l, 2]], axis=-1)
        ent[f"enc{l}_qkv_b"] = np.concatenate([bq, p["attn_b"][l, 1], p["attn_b"][l, 2]], axis=-1)
        ent[f"enc{l}_o_w"] = p["attn_w"][l, 3]
        ent[f"enc{l}_o_b"] = p["attn_b"][l, 3]
        ent[f"enc{l}_ln1_g"] = p["ln_g"][l, 0]
        ent[f"enc{l}_ln1_b"] = p["ln_b"][l, 0]
        ent[f"enc{l}_ln2_g"] = p["ln_g"][l, 1]
        ent[f"enc{l}_ln2_b"] = p["ln_b"][l, 1]
        ent[f"enc{l}_ffn1_w"] = p["ffn1_w"][l].reshape(FFN_KERNEL * HALF, HALF)
        ent[f"enc{l}_ffn1_b"] = p["ffn1_b"][l]
        ent[f"enc{l}_ffn2_w"] = p["ffn2_w"][l].reshape(FFN_KERNEL * HALF, HALF)
        ent[f"enc{l}_ffn2_b"] = p["ffn2_b"][l]
    ent["pre_w"] = p["pre_w"]
    ent["pre_b"] = p["pre_b"]
    for i in range(N_RESBLOCKS):
        ent[f"wn{i}_in_w"] = p["wn_in_w"][i].reshape(KERNEL_SIZE * EMB, 2 * EMB)
        ent[f"wn{i}_in_b"] = p["wn_in_b"][i]
        ent[f"wn{i}_rs_w"] = p["wn_rs_w"][i]
        ent[f"wn{i}_rs_b"] = p["wn_rs_b"][i]
    ent["post_w"] = p["post_w"]
    ent["post_b"] = p["post_b"]

    slab = np.zeros((SLAB_ROWS, SLAB_COLS), np.float32)
    for name, arr in ent.items():
        r0, rows, cols = PARAM_LAYOUT[name]
        assert arr.shape == (rows, cols), (name, arr.shape, (rows, cols))
        slab[r0:r0 + rows, :cols] = arr
    return jnp.asarray(slab)


# -----------------------------------------------------------------------------
# Shared math
# -----------------------------------------------------------------------------
def _layer_norm(x, g, b):
    mu = jnp.mean(x, axis=-1, keepdims=True)
    var = jnp.mean(jnp.square(x - mu), axis=-1, keepdims=True)
    return (x - mu) * jax.lax.rsqrt(var + LN_EPS) * g + b


# -----------------------------------------------------------------------------
# Pallas kernel: one grid step == one batch element (parallel over batch)
# -----------------------------------------------------------------------------
def coupling_kernel(len_ref, x_ref, slab_ref, out_ref, *, reverse):
    f32 = jnp.float32
    b = pl.program_id(0)
    length = len_ref[b]                          # int32 scalar (SMEM prefetch)

    xb = x_ref[0].astype(f32)                    # (T, C)
    t = xb.shape[0]
    x0 = xb[:, :HALF]
    x1 = xb[:, HALF:]

    # Masks built in-kernel (iota + compare): nothing mask-shaped is DMA'd.
    row_id = jax.lax.broadcasted_iota(jnp.int32, (t, 1), 0)
    mask = (row_id < length).astype(f32)                         # (T, 1)
    q_ok = jax.lax.broadcasted_iota(jnp.int32, (t, t), 0) < length
    k_ok = jax.lax.broadcasted_iota(jnp.int32, (t, t), 1) < length
    attn_ok = jnp.logical_and(q_ok, k_ok)                        # (T, T)

    def P(name):
        r0, rows, cols = PARAM_LAYOUT[name]
        return slab_ref[r0:r0 + rows, 0:cols]

    def conv1d_same(xf, w_flat, bias, ksize):
        """Per-sequence 'same' conv via im2col -> a single MXU matmul."""
        cin = xf.shape[-1]
        pad = (ksize - 1) // 2
        zp = jnp.zeros((pad, cin), f32)
        xfp = jnp.concatenate([zp, xf, zp], axis=0)              # (T + 2*pad, cin)
        x_cat = jnp.concatenate([xfp[k:k + t, :] for k in range(ksize)], axis=-1)
        return jnp.dot(x_cat, w_flat, preferred_element_type=f32) + bias

    # ---------------- pre_transformer (attentions.Encoder) ----------------
    h = x0 * mask
    for l in range(N_ENC_LAYERS):
        # fused Q/K/V projection: one (T, C) @ (C, 3C) matmul (Q pre-scaled)
        qkv = (jnp.dot(h, P(f"enc{l}_qkv_w"), preferred_element_type=f32)
               + P(f"enc{l}_qkv_b"))
        heads = []
        for hd in range(N_HEADS):
            q_h = qkv[:, hd * HEAD_DIM:(hd + 1) * HEAD_DIM]
            k_h = qkv[:, HALF + hd * HEAD_DIM:HALF + (hd + 1) * HEAD_DIM]
            v_h = qkv[:, 2 * HALF + hd * HEAD_DIM:2 * HALF + (hd + 1) * HEAD_DIM]
            scores = jax.lax.dot_general(
                q_h, k_h, (((1,), (1,)), ((), ())),
                preferred_element_type=f32)                      # (T, T)
            scores = jnp.where(attn_ok, scores, -1e4)
            scores = scores - jnp.max(scores, axis=-1, keepdims=True)
            pr = jnp.exp(scores)
            pr = pr / jnp.sum(pr, axis=-1, keepdims=True)        # exact softmax
            heads.append(jnp.dot(pr, v_h, preferred_element_type=f32))
        y = jnp.concatenate(heads, axis=-1)
        y = (jnp.dot(y, P(f"enc{l}_o_w"), preferred_element_type=f32)
             + P(f"enc{l}_o_b"))
        h = _layer_norm(h + y, P(f"enc{l}_ln1_g"), P(f"enc{l}_ln1_b"))

        # FFN: conv(k=3) -> relu -> conv(k=3), masked as in VITS
        y = conv1d_same(h * mask, P(f"enc{l}_ffn1_w"), P(f"enc{l}_ffn1_b"), FFN_KERNEL)
        y = jnp.maximum(y, 0.0)
        y = conv1d_same(y * mask, P(f"enc{l}_ffn2_w"), P(f"enc{l}_ffn2_b"), FFN_KERNEL)
        y = y * mask
        h = _layer_norm(h + y, P(f"enc{l}_ln2_g"), P(f"enc{l}_ln2_b"))
    x0_new = h * mask + x0                                       # residual connection

    # ---------------- pre 1x1 conv ----------------
    hw = (jnp.dot(x0_new, P("pre_w"), preferred_element_type=f32)
          + P("pre_b")) * mask                                   # (T, EMB)

    # ---------------- WN (gin_channels == 0 -> g is None) ----------------
    out_acc = jnp.zeros((t, EMB), f32)
    for i in range(N_RESBLOCKS):
        x_in = conv1d_same(hw, P(f"wn{i}_in_w"), P(f"wn{i}_in_b"), KERNEL_SIZE)
        acts = jnp.tanh(x_in[:, :EMB]) * jax.nn.sigmoid(x_in[:, EMB:])
        rs = (jnp.dot(acts, P(f"wn{i}_rs_w"), preferred_element_type=f32)
              + P(f"wn{i}_rs_b"))                                # (T, 2*EMB)
        if i < N_RESBLOCKS - 1:
            hw = (hw + rs[:, :EMB]) * mask
            out_acc = out_acc + rs[:, EMB:]
        else:
            out_acc = out_acc + rs[:, :EMB]   # last layer: Conv1d(EMB, EMB, 1)
    wn_out = out_acc * mask

    # ---------------- post 1x1 conv + additive coupling ----------------
    x1_mean = (jnp.dot(wn_out, P("post_w"), preferred_element_type=f32)
               + P("post_b")) * mask
    if reverse:
        x1_new = (x1 - x1_mean) * mask
    else:
        x1_new = x1_mean + x1 * mask

    # single 16-channel (T, C) store per grid step
    out_ref[0] = jnp.concatenate([x0_new, x1_new], axis=-1).astype(out_ref.dtype)


def residual_coupling_transformer_layer(x, x_mask, slab, *, reverse=False,
                                        speaker_id_embedded=None):
    """x: (B, C, T) f32 (PyTorch NCT); x_mask: (B, 1, T) prefix mask; slab: packed params."""
    del speaker_id_embedded  # speaker_id_embedding_dim == 0 -> unused
    B_, C, T_ = x.shape
    assert C == IN_CHANNELS

    # NCT -> (B, T, C): one fused activation input, one DMA per grid step
    x_btc = jnp.transpose(x, (0, 2, 1)).astype(jnp.float32)
    # VITS masks are prefix (sequence_mask) masks -> only lengths go to SMEM
    lengths = jnp.sum(x_mask.astype(jnp.int32), axis=(1, 2)).astype(jnp.int32)   # (B,)

    kernel = functools.partial(coupling_kernel, reverse=reverse)

    y_btc = pl.pallas_call(
        kernel,
        out_shape=jax.ShapeDtypeStruct((B_, T_, IN_CHANNELS), jnp.float32),
        grid_spec=pltpu.PrefetchScalarGridSpec(
            num_scalar_prefetch=1,
            grid=(B_,),
            in_specs=[
                pl.BlockSpec((1, T_, IN_CHANNELS), lambda b, lens: (b, 0, 0)),
                # constant block index -> the param slab is DMA'd once
                pl.BlockSpec((SLAB_ROWS, SLAB_COLS), lambda b, lens: (0, 0)),
            ],
            out_specs=pl.BlockSpec((1, T_, IN_CHANNELS), lambda b, lens: (b, 0, 0)),
        ),
        compiler_params=pltpu.CompilerParams(
            dimension_semantics=("parallel",)),
    )(lengths, x_btc, slab)

    return jnp.transpose(y_btc, (0, 2, 1))             # back to NCT


# -----------------------------------------------------------------------------
# Pure-JAX reference (per-batch, mirrors the PyTorch module) for validation
# -----------------------------------------------------------------------------
def _conv1d_same_ref(x, w_taps, b):
    K, Cin, Cout = w_taps.shape
    pad = (K - 1) // 2
    Tl = x.shape[0]
    z = jnp.zeros((pad, Cin), jnp.float32)
    xp = jnp.concatenate([z, x, z], axis=0)
    acc = jnp.zeros((Tl, Cout), jnp.float32)
    for k in range(K):
        acc = acc + jnp.dot(xp[k:k + Tl, :], w_taps[k])
    return acc + b


def _reference_single(x0, x1, mask, mask_t, p, reverse):
    f32 = jnp.float32
    x0 = x0.astype(f32)
    x1 = x1.astype(f32)
    mask = mask.astype(f32)
    mask_t = mask_t.astype(f32)
    attn_mask = mask * mask_t
    scale = 1.0 / math.sqrt(HEAD_DIM)

    h = x0 * mask
    for l in range(N_ENC_LAYERS):
        q = jnp.dot(h, p["attn_w"][l, 0]) + p["attn_b"][l, 0]
        k = jnp.dot(h, p["attn_w"][l, 1]) + p["attn_b"][l, 1]
        v = jnp.dot(h, p["attn_w"][l, 2]) + p["attn_b"][l, 2]
        heads = []
        for hd in range(N_HEADS):
            sl = slice(hd * HEAD_DIM, (hd + 1) * HEAD_DIM)
            scores = jnp.dot(q[:, sl], k[:, sl].T) * scale
            scores = jnp.where(attn_mask > 0, scores, -1e4)
            scores = scores - jnp.max(scores, axis=-1, keepdims=True)
            pr = jnp.exp(scores)
            pr = pr / jnp.sum(pr, axis=-1, keepdims=True)
            heads.append(jnp.dot(pr, v[:, sl]))
        y = jnp.concatenate(heads, axis=-1)
        y = jnp.dot(y, p["attn_w"][l, 3]) + p["attn_b"][l, 3]
        h = _layer_norm(h + y, p["ln_g"][l, 0], p["ln_b"][l, 0])

        y = _conv1d_same_ref(h * mask, p["ffn1_w"][l], p["ffn1_b"][l])
        y = jnp.maximum(y, 0.0)
        y = _conv1d_same_ref(y * mask, p["ffn2_w"][l], p["ffn2_b"][l])
        y = y * mask
        h = _layer_norm(h + y, p["ln_g"][l, 1], p["ln_b"][l, 1])
    x0_new = h * mask + x0

    hw = (jnp.dot(x0_new, p["pre_w"]) + p["pre_b"]) * mask

    out_acc = jnp.zeros((x0.shape[0], EMB), f32)
    for i in range(N_RESBLOCKS):
        x_in = _conv1d_same_ref(hw, p["wn_in_w"][i], p["wn_in_b"][i])
        acts = jnp.tanh(x_in[:, :EMB]) * jax.nn.sigmoid(x_in[:, EMB:])
        rs = jnp.dot(acts, p["wn_rs_w"][i]) + p["wn_rs_b"][i]
        if i < N_RESBLOCKS - 1:
            hw = (hw + rs[:, :EMB]) * mask
            out_acc = out_acc + rs[:, EMB:]
        else:
            out_acc = out_acc + rs[:, :EMB]
    wn_out = out_acc * mask

    x1_mean = (jnp.dot(wn_out, p["post_w"]) + p["post_b"]) * mask
    if reverse:
        x1_new = (x1 - x1_mean) * mask
    else:
        x1_new = x1_mean + x1 * mask
    return x0_new, x1_new


def reference_forward(x, x_mask, params, *, reverse=False):
    x_ntc = jnp.transpose(x, (0, 2, 1)).astype(jnp.float32)
    mask_tc = jnp.transpose(x_mask, (0, 2, 1)).astype(jnp.float32)
    mask_1t = x_mask.astype(jnp.float32)

    def single(x0, x1, m_tc, m_1t):
        return _reference_single(x0, x1, m_tc, m_1t, params, reverse)

    y0, y1 = jax.vmap(single)(x_ntc[..., :HALF], x_ntc[..., HALF:],
                              mask_tc, mask_1t)
    y = jnp.concatenate([y0, y1], axis=-1)
    return jnp.transpose(y, (0, 2, 1))


# -----------------------------------------------------------------------------
# Deterministic parameter initialization (shapes from the module __init__)
# -----------------------------------------------------------------------------
def init_params(key):
    keys = jax.random.split(key, 16)

    def nrm(k, shape, scale):
        return (scale * jax.random.normal(k, shape)).astype(jnp.float32)

    params = {
        # pre_transformer: per layer 4x (1x1 conv) q/k/v/o, 2x LayerNorm, 2x FFN conv
        "attn_w": nrm(keys[0], (N_ENC_LAYERS, 4, HALF, HALF), 0.3),
        "attn_b": nrm(keys[1], (N_ENC_LAYERS, 4, 1, HALF), 0.05),
        "ln_g": jnp.ones((N_ENC_LAYERS, 2, 1, HALF), jnp.float32),
        "ln_b": jnp.zeros((N_ENC_LAYERS, 2, 1, HALF), jnp.float32),
        "ffn1_w": nrm(keys[2], (N_ENC_LAYERS, FFN_KERNEL, HALF, HALF), 0.2),
        "ffn1_b": nrm(keys[3], (N_ENC_LAYERS, 1, HALF), 0.05),
        "ffn2_w": nrm(keys[4], (N_ENC_LAYERS, FFN_KERNEL, HALF, HALF), 0.2),
        "ffn2_b": nrm(keys[5], (N_ENC_LAYERS, 1, HALF), 0.05),
        # pre: Conv1d(HALF, EMB, 1)
        "pre_w": nrm(keys[6], (HALF, EMB), 0.2),
        "pre_b": nrm(keys[7], (1, EMB), 0.05),
        # WN: in_layers Conv1d(EMB, 2*EMB, 5), res_skip Conv1d(EMB, 2*EMB or EMB, 1)
        "wn_in_w": nrm(keys[8], (N_RESBLOCKS, KERNEL_SIZE, EMB, 2 * EMB), 0.15),
        "wn_in_b": nrm(keys[9], (N_RESBLOCKS, 1, 2 * EMB), 0.05),
        "wn_rs_w": nrm(keys[10], (N_RESBLOCKS, EMB, 2 * EMB), 0.15),
        "wn_rs_b": nrm(keys[11], (N_RESBLOCKS, 1, 2 * EMB), 0.05),
        # post: Conv1d(EMB, HALF, 1).  The PyTorch module zero-inits this
        # (identity flow at init); small non-zero values so the WN path is
        # actually exercised by the test.
        "post_w": nrm(keys[12], (EMB, HALF), 0.1),
        "post_b": nrm(keys[13], (1, HALF), 0.02),
    }
    # Last WN res_skip layer is Conv1d(EMB, EMB, 1): zero the unused padded half.
    params["wn_rs_w"] = params["wn_rs_w"].at[N_RESBLOCKS - 1, :, EMB:].set(0.0)
    params["wn_rs_b"] = params["wn_rs_b"].at[N_RESBLOCKS - 1, :, EMB:].set(0.0)
    return params


# -----------------------------------------------------------------------------
# Main
# -----------------------------------------------------------------------------
if __name__ == "__main__":
    key = jax.random.PRNGKey(0)
    kp, kx = jax.random.split(key)
    params = init_params(kp)
    slab = pack_params(params)        # packed ONCE (host-side), reused per call

    x = jax.random.normal(kx, (B, IN_CHANNELS, T), dtype=jnp.float32)
    lengths = jnp.array([T, T - 4], dtype=jnp.int32)
    pos = jnp.arange(T)[None, :]
    x_mask = (pos < lengths[:, None]).astype(jnp.float32)[:, None, :]   # (B, 1, T)

    y = residual_coupling_transformer_layer(x, x_mask, slab, reverse=False)
    y = jax.block_until_ready(y)

    y_ref = jax.block_until_ready(reference_forward(x, x_mask, params, reverse=False))

    assert y.shape == (B, IN_CHANNELS, T)
    assert bool(jnp.all(jnp.isfinite(y)))
    # exact softmax + identical per-sequence math: only matmul accumulation-order
    # differences remain, so a tight tolerance is safe.
    np.testing.assert_allclose(np.asarray(y), np.asarray(y_ref),
                               atol=2e-3, rtol=2e-3)
    print("KERNEL_OK")
</pallas_src>

<mosaic_0001>
module attributes {stable_mosaic.version = 11 : i64} {
  func.func @coupling_kernel(%arg0: i32, %arg1: memref<2xi32, #tpu.memory_space<smem>>, %arg2: memref<1x16x16xf32, #tpu.memory_space<vmem>>, %arg3: memref<520x128xf32, #tpu.memory_space<vmem>>, %arg4: memref<1x16x16xf32, #tpu.memory_space<vmem>>) attributes {dimension_semantics = [#tpu.dimension_semantics<parallel>], iteration_bounds = array<i64: 2>, scalar_prefetch = 1 : i64, scratch_operands = 0 : i64, tpu.core_type = #tpu.core_type<tc>, window_params = [{transform_indices = @transform_0, window_bounds = array<i64: 1, 16, 16>}, {pipeline_mode = #tpu.pipeline_mode<synchronous>, transform_indices = @transform_1, window_bounds = array<i64: 520, 128>}, {transform_indices = @transform_2, window_bounds = array<i64: 1, 16, 16>}]} {
    %0 = arith.index_cast %arg0 : i32 to index
    %1 = memref.load %arg1[%0] : memref<2xi32, #tpu.memory_space<smem>>
    %c0 = arith.constant 0 : index
    %c0_0 = arith.constant 0 : index
    %c0_1 = arith.constant 0 : index
    %2 = vector.load %arg2[%c0, %c0_0, %c0_1] : memref<1x16x16xf32, #tpu.memory_space<vmem>>, vector<1x16x16xf32>
    %3 = vector.shape_cast %2 : vector<1x16x16xf32> to vector<16x16xf32>
    %4 = vector.extract_strided_slice %3 {offsets = [0, 0], sizes = [16, 8], strides = [1, 1]} : vector<16x16xf32> to vector<16x8xf32>
    %5 = vector.extract_strided_slice %3 {offsets = [0, 8], sizes = [16, 8], strides = [1, 1]} : vector<16x16xf32> to vector<16x8xf32>
    %6 = tpu.iota {dimensions = array<i32: 0>} : vector<16x1xi32>
    %7 = vector.broadcast %1 : i32 to vector<16x1xi32>
    %8 = arith.cmpi slt, %6, %7 : vector<16x1xi32>
    %9 = arith.extui %8 : vector<16x1xi1> to vector<16x1xi32>
    %10 = arith.sitofp %9 : vector<16x1xi32> to vector<16x1xf32>
    %11 = tpu.iota {dimensions = array<i32: 0>} : vector<16x16xi32>
    %12 = vector.broadcast %1 : i32 to vector<16x16xi32>
    %13 = arith.cmpi slt, %11, %12 : vector<16x16xi32>
    %14 = tpu.iota {dimensions = array<i32: 1>} : vector<16x16xi32>
    %15 = vector.broadcast %1 : i32 to vector<16x16xi32>
    %16 = arith.cmpi slt, %14, %15 : vector<16x16xi32>
    %17 = arith.andi %13, %16 : vector<16x16xi1>
    %18 = vector.broadcast %10 : vector<16x1xf32> to vector<16x8xf32>
    %19 = arith.mulf %4, %18 : vector<16x8xf32>
    %c0_2 = arith.constant 0 : index
    %c0_3 = arith.constant 0 : index
    %20 = vector.load %arg3[%c0_2, %c0_3] : memref<520x128xf32, #tpu.memory_space<vmem>>, vector<8x24xf32>
    %cst = arith.constant dense<0.000000e+00> : vector<16x24xf32>
    %21 = tpu.matmul %19, %20, %cst {dimension_numbers = #tpu.dot_dimension_numbers<[1], [0], [0], [1], [0, 0, 1, 1], [], []>} : vector<16x8xf32>, vector<8x24xf32>, vector<16x24xf32> -> vector<16x24xf32>
    %c8 = arith.constant 8 : index
    %c0_4 = arith.constant 0 : index
    %22 = vector.load %arg3[%c8, %c0_4] : memref<520x128xf32, #tpu.memory_space<vmem>>, vector<1x24xf32>
    %23 = vector.broadcast %22 : vector<1x24xf32> to vector<16x24xf32>
    %24 = arith.addf %21, %23 : vector<16x24xf32>
    %25 = vector.extract_strided_slice %24 {offsets = [0, 0], sizes = [16, 4], strides = [1, 1]} : vector<16x24xf32> to vector<16x4xf32>
    %26 = vector.extract_strided_slice %24 {offsets = [0, 8], sizes = [16, 4], strides = [1, 1]} : vector<16x24xf32> to vector<16x4xf32>
    %27 = vector.extract_strided_slice %24 {offsets = [0, 16], sizes = [16, 4], strides = [1, 1]} : vector<16x24xf32> to vector<16x4xf32>
    %cst_5 = arith.constant dense<0.000000e+00> : vector<16x16xf32>
    %28 = tpu.matmul %25, %26, %cst_5 {dimension_numbers = #tpu.dot_dimension_numbers<[1], [1], [0], [0], [0, 0, 1, 0], [], []>} : vector<16x4xf32>, vector<16x4xf32>, vector<16x16xf32> -> vector<16x16xf32>
    %cst_6 = arith.constant -1.000000e+04 : f32
    %29 = vector.broadcast %cst_6 : f32 to vector<16x16xf32>
    %30 = arith.select %17, %28, %29 : vector<16x16xi1>, vector<16x16xf32>
    %cst_7 = arith.constant dense<0xFF800000> : vector<16xf32>
    %31 = vector.multi_reduction <maximumf>, %30, %cst_7 [1] : vector<16x16xf32> to vector<16xf32>
    %32 = vector.shape_cast %31 : vector<16xf32> to vector<16x1xf32>
    %33 = vector.broadcast %32 : vector<16x1xf32> to vector<16x16xf32>
    %34 = arith.subf %30, %33 : vector<16x16xf32>
    %35 = math.exp %34 : vector<16x16xf32>
    %cst_8 = arith.constant dense<0.000000e+00> : vector<16xf32>
    %36 = vector.multi_reduction <add>, %35, %cst_8 [1] : vector<16x16xf32> to vector<16xf32>
    %37 = vector.shape_cast %36 : vector<16xf32> to vector<16x1xf32>
    %38 = vector.broadcast %37 : vector<16x1xf32> to vector<16x16xf32>
    %39 = arith.divf %35, %38 : vector<16x16xf32>
    %cst_9 = arith.constant dense<0.000000e+00> : vector<16x4xf32>
    %40 = tpu.matmul %39, %27, %cst_9 {dimension_numbers = #tpu.dot_dimension_numbers<[1], [0], [0], [1], [0, 0, 1, 1], [], []>} : vector<16x16xf32>, vector<16x4xf32>, vector<16x4xf32> -> vector<16x4xf32>
    %41 = vector.extract_strided_slice %24 {offsets = [0, 4], sizes = [16, 4], strides = [1, 1]} : vector<16x24xf32> to vector<16x4xf32>
    %42 = vector.extract_strided_slice %24 {offsets = [0, 12], sizes = [16, 4], strides = [1, 1]} : vector<16x24xf32> to vector<16x4xf32>
    %43 = vector.extract_strided_slice %24 {offsets = [0, 20], sizes = [16, 4], strides = [1, 1]} : vector<16x24xf32> to vector<16x4xf32>
    %cst_10 = arith.constant dense<0.000000e+00> : vector<16x16xf32>
    %44 = tpu.matmul %41, %42, %cst_10 {dimension_numbers = #tpu.dot_dimension_numbers<[1], [1], [0], [0], [0, 0, 1, 0], [], []>} : vector<16x4xf32>, vector<16x4xf32>, vector<16x16xf32> -> vector<16x16xf32>
    %cst_11 = arith.constant -1.000000e+04 : f32
    %45 = vector.broadcast %cst_11 : f32 to vector<16x16xf32>
    %46 = arith.select %17, %44, %45 : vector<16x16xi1>, vector<16x16xf32>
    %cst_12 = arith.constant dense<0xFF800000> : vector<16xf32>
    %47 = vector.multi_reduction <maximumf>, %46, %cst_12 [1] : vector<16x16xf32> to vector<16xf32>
    %48 = vector.shape_cast %47 : vector<16xf32> to vector<16x1xf32>
    %49 = vector.broadcast %48 : vector<16x1xf32> to vector<16x16xf32>
    %50 = arith.subf %46, %49 : vector<16x16xf32>
    %51 = math.exp %50 : vector<16x16xf32>
    %cst_13 = arith.constant dense<0.000000e+00> : vector<16xf32>
    %52 = vector.multi_reduction <add>, %51, %cst_13 [1] : vector<16x16xf32> to vector<16xf32>
    %53 = vector.shape_cast %52 : vector<16xf32> to vector<16x1xf32>
    %54 = vector.broadcast %53 : vector<16x1xf32> to vector<16x16xf32>
    %55 = arith.divf %51, %54 : vector<16x16xf32>
    %cst_14 = arith.constant dense<0.000000e+00> : vector<16x4xf32>
    %56 = tpu.matmul %55, %43, %cst_14 {dimension_numbers = #tpu.dot_dimension_numbers<[1], [0], [0], [1], [0, 0, 1, 1], [], []>} : vector<16x16xf32>, vector<16x4xf32>, vector<16x4xf32> -> vector<16x4xf32>
    %57 = tpu.concatenate %40, %56 in 1 : vector<16x4xf32>, vector<16x4xf32> -> vector<16x8xf32>
    %c16 = arith.constant 16 : index
    %c0_15 = arith.constant 0 : index
    %58 = vector.load %arg3[%c16, %c0_15] : memref<520x128xf32, #tpu.memory_space<vmem>>, vector<8x8xf32>
    %cst_16 = arith.constant dense<0.000000e+00> : vector<16x8xf32>
    %59 = tpu.matmul %57, %58, %cst_16 {dimension_numbers = #tpu.dot_dimension_numbers<[1], [0], [0], [1], [0, 0, 1, 1], [], []>} : vector<16x8xf32>, vector<8x8xf32>, vector<16x8xf32> -> vector<16x8xf32>
    %c24 = arith.constant 24 : index
    %c0_17 = arith.constant 0 : index
    %60 = vector.load %arg3[%c24, %c0_17] : memref<520x128xf32, #tpu.memory_space<vmem>>, vector<1x8xf32>
    %61 = vector.broadcast %60 : vector<1x8xf32> to vector<16x8xf32>
    %62 = arith.addf %59, %61 : vector<16x8xf32>
    %63 = arith.addf %19, %62 : vector<16x8xf32>
    %c32 = arith.constant 32 : index
    %c0_18 = arith.constant 0 : index
    %64 = vector.load %arg3[%c32, %c0_18] : memref<520x128xf32, #tpu.memory_space<vmem>>, vector<1x8xf32>
    %c40 = arith.constant 40 : index
    %c0_19 = arith.constant 0 : index
    %65 = vector.load %arg3[%c40, %c0_19] : memref<520x128xf32, #tpu.memory_space<vmem>>, vector<1x8xf32>
    %cst_20 = arith.constant dense<0.000000e+00> : vector<16xf32>
    %66 = vector.multi_reduction <add>, %63, %cst_20 [1] : vector<16x8xf32> to vector<16xf32>
    %67 = vector.shape_cast %66 : vector<16xf32> to vector<16x1xf32>
    %cst_21 = arith.constant 8.000000e+00 : f32
    %68 = vector.broadcast %cst_21 : f32 to vector<16x1xf32>
    %69 = arith.divf %67, %68 : vector<16x1xf32>
    %70 = vector.broadcast %69 : vector<16x1xf32> to vector<16x8xf32>
    %71 = arith.subf %63, %70 : vector<16x8xf32>
    %72 = arith.mulf %71, %71 : vector<16x8xf32>
    %cst_22 = arith.constant dense<0.000000e+00> : vector<16xf32>
    %73 = vector.multi_reduction <add>, %72, %cst_22 [1] : vector<16x8xf32> to vector<16xf32>
    %74 = vector.shape_cast %73 : vector<16xf32> to vector<16x1xf32>
    %cst_23 = arith.constant 8.000000e+00 : f32
    %75 = vector.broadcast %cst_23 : f32 to vector<16x1xf32>
    %76 = arith.divf %74, %75 : vector<16x1xf32>
    %77 = vector.broadcast %69 : vector<16x1xf32> to vector<16x8xf32>
    %78 = arith.subf %63, %77 : vector<16x8xf32>
    %cst_24 = arith.constant 9.99999974E-6 : f32
    %79 = vector.broadcast %cst_24 : f32 to vector<16x1xf32>
    %80 = arith.addf %76, %79 : vector<16x1xf32>
    %81 = math.rsqrt %80 : vector<16x1xf32>
    %82 = vector.broadcast %81 : vector<16x1xf32> to vector<16x8xf32>
    %83 = arith.mulf %78, %82 : vector<16x8xf32>
    %84 = vector.broadcast %64 : vector<1x8xf32> to vector<16x8xf32>
    %85 = arith.mulf %83, %84 : vector<16x8xf32>
    %86 = vector.broadcast %65 : vector<1x8xf32> to vector<16x8xf32>
    %87 = arith.addf %85, %86 : vector<16x8xf32>
    %88 = vector.broadcast %10 : vector<16x1xf32> to vector<16x8xf32>
    %89 = arith.mulf %87, %88 : vector<16x8xf32>
    %c64 = arith.constant 64 : index
    %c0_25 = arith.constant 0 : index
    %90 = vector.load %arg3[%c64, %c0_25] : memref<520x128xf32, #tpu.memory_space<vmem>>, vector<24x8xf32>
    %c88 = arith.constant 88 : index
    %c0_26 = arith.constant 0 : index
    %91 = vector.load %arg3[%c88, %c0_26] : memref<520x128xf32, #tpu.memory_space<vmem>>, vector<1x8xf32>
    %cst_27 = arith.constant 0.000000e+00 : f32
    %92 = vector.broadcast %cst_27 : f32 to vector<1x8xf32>
    %93 = tpu.concatenate %92, %89, %92 in 0 : vector<1x8xf32>, vector<16x8xf32>, vector<1x8xf32> -> vector<18x8xf32>
    %94 = vector.extract_strided_slice %93 {offsets = [0, 0], sizes = [16, 8], strides = [1, 1]} : vector<18x8xf32> to vector<16x8xf32>
    %95 = vector.extract_strided_slice %93 {offsets = [1, 0], sizes = [16, 8], strides = [1, 1]} : vector<18x8xf32> to vector<16x8xf32>
    %96 = vector.extract_strided_slice %93 {offsets = [2, 0], sizes = [16, 8], strides = [1, 1]} : vector<18x8xf32> to vector<16x8xf32>
    %97 = tpu.concatenate %94, %95, %96 in 1 : vector<16x8xf32>, vector<16x8xf32>, vector<16x8xf32> -> vector<16x24xf32>
    %cst_28 = arith.constant dense<0.000000e+00> : vector<16x8xf32>
    %98 = tpu.matmul %97, %90, %cst_28 {dimension_numbers = #tpu.dot_dimension_numbers<[1], [0], [0], [1], [0, 0, 1, 1], [], []>} : vector<16x24xf32>, vector<24x8xf32>, vector<16x8xf32> -> vector<16x8xf32>
    %99 = vector.broadcast %91 : vector<1x8xf32> to vector<16x8xf32>
    %100 = arith.addf %98, %99 : vector<16x8xf32>
    %cst_29 = arith.constant 0.000000e+00 : f32
    %101 = vector.broadcast %cst_29 : f32 to vector<16x8xf32>
    %102 = arith.maximumf %100, %101 : vector<16x8xf32>
    %103 = vector.broadcast %10 : vector<16x1xf32> to vector<16x8xf32>
    %104 = arith.mulf %102, %103 : vector<16x8xf32>
    %c96 = arith.constant 96 : index
    %c0_30 = arith.constant 0 : index
    %105 = vector.load %arg3[%c96, %c0_30] : memref<520x128xf32, #tpu.memory_space<vmem>>, vector<24x8xf32>
    %c120 = arith.constant 120 : index
    %c0_31 = arith.constant 0 : index
    %106 = vector.load %arg3[%c120, %c0_31] : memref<520x128xf32, #tpu.memory_space<vmem>>, vector<1x8xf32>
    %cst_32 = arith.constant 0.000000e+00 : f32
    %107 = vector.broadcast %cst_32 : f32 to vector<1x8xf32>
    %108 = tpu.concatenate %107, %104, %107 in 0 : vector<1x8xf32>, vector<16x8xf32>, vector<1x8xf32> -> vector<18x8xf32>
    %109 = vector.extract_strided_slice %108 {offsets = [0, 0], sizes = [16, 8], strides = [1, 1]} : vector<18x8xf32> to vector<16x8xf32>
    %110 = vector.extract_strided_slice %108 {offsets = [1, 0], sizes = [16, 8], strides = [1, 1]} : vector<18x8xf32> to vector<16x8xf32>
    %111 = vector.extract_strided_slice %108 {offsets = [2, 0], sizes = [16, 8], strides = [1, 1]} : vector<18x8xf32> to vector<16x8xf32>
    %112 = tpu.concatenate %109, %110, %111 in 1 : vector<16x8xf32>, vector<16x8xf32>, vector<16x8xf32> -> vector<16x24xf32>
    %cst_33 = arith.constant dense<0.000000e+00> : vector<16x8xf32>
    %113 = tpu.matmul %112, %105, %cst_33 {dimension_numbers = #tpu.dot_dimension_numbers<[1], [0], [0], [1], [0, 0, 1, 1], [], []>} : vector<16x24xf32>, vector<24x8xf32>, vector<16x8xf32> -> vector<16x8xf32>
    %114 = vector.broadcast %106 : vector<1x8xf32> to vector<16x8xf32>
    %115 = arith.addf %113, %114 : vector<16x8xf32>
    %116 = vector.broadcast %10 : vector<16x1xf32> to vector<16x8xf32>
    %117 = arith.mulf %115, %116 : vector<16x8xf32>
    %118 = arith.addf %87, %117 : vector<16x8xf32>
    %c48 = arith.constant 48 : index
    %c0_34 = arith.constant 0 : index
    %119 = vector.load %arg3[%c48, %c0_34] : memref<520x128xf32, #tpu.memory_space<vmem>>, vector<1x8xf32>
    %c56 = arith.constant 56 : index
    %c0_35 = arith.constant 0 : index
    %120 = vector.load %arg3[%c56, %c0_35] : memref<520x128xf32, #tpu.memory_space<vmem>>, vector<1x8xf32>
    %cst_36 = arith.constant dense<0.000000e+00> : vector<16xf32>
    %121 = vector.multi_reduction <add>, %118, %cst_36 [1] : vector<16x8xf32> to vector<16xf32>
    %122 = vector.shape_cast %121 : vector<16xf32> to vector<16x1xf32>
    %cst_37 = arith.constant 8.000000e+00 : f32
    %123 = vector.broadcast %cst_37 : f32 to vector<16x1xf32>
    %124 = arith.divf %122, %123 : vector<16x1xf32>
    %125 = vector.broadcast %124 : vector<16x1xf32> to vector<16x8xf32>
    %126 = arith.subf %118, %125 : vector<16x8xf32>
    %127 = arith.mulf %126, %126 : vector<16x8xf32>
    %cst_38 = arith.constant dense<0.000000e+00> : vector<16xf32>
    %128 = vector.multi_reduction <add>, %127, %cst_38 [1] : vector<16x8xf32> to vector<16xf32>
    %129 = vector.shape_cast %128 : vector<16xf32> to vector<16x1xf32>
    %cst_39 = arith.constant 8.000000e+00 : f32
    %130 = vector.broadcast %cst_39 : f32 to vector<16x1xf32>
    %131 = arith.divf %129, %130 : vector<16x1xf32>
    %132 = vector.broadcast %124 : vector<16x1xf32> to vector<16x8xf32>
    %133 = arith.subf %118, %132 : vector<16x8xf32>
    %cst_40 = arith.constant 9.99999974E-6 : f32
    %134 = vector.broadcast %cst_40 : f32 to vector<16x1xf32>
    %135 = arith.addf %131, %134 : vector<16x1xf32>
    %136 = math.rsqrt %135 : vector<16x1xf32>
    %137 = vector.broadcast %136 : vector<16x1xf32> to vector<16x8xf32>
    %138 = arith.mulf %133, %137 : vector<16x8xf32>
    %139 = vector.broadcast %119 : vector<1x8xf32> to vector<16x8xf32>
    %140 = arith.mulf %138, %139 : vector<16x8xf32>
    %141 = vector.broadcast %120 : vector<1x8xf32> to vector<16x8xf32>
    %142 = arith.addf %140, %141 : vector<16x8xf32>
    %c128 = arith.constant 128 : index
    %c0_41 = arith.constant 0 : index
    %143 = vector.load %arg3[%c128, %c0_41] : memref<520x128xf32, #tpu.memory_space<vmem>>, vector<8x24xf32>
    %cst_42 = arith.constant dense<0.000000e+00> : vector<16x24xf32>
    %144 = tpu.matmul %142, %143, %cst_42 {dimension_numbers = #tpu.dot_dimension_numbers<[1], [0], [0], [1], [0, 0, 1, 1], [], []>} : vector<16x8xf32>, vector<8x24xf32>, vector<16x24xf32> -> vector<16x24xf32>
    %c136 = arith.constant 136 : index
    %c0_43 = arith.constant 0 : index
    %145 = vector.load %arg3[%c136, %c0_43] : memref<520x128xf32, #tpu.memory_space<vmem>>, vector<1x24xf32>
    %146 = vector.broadcast %145 : vector<1x24xf32> to vector<16x24xf32>
    %147 = arith.addf %144, %146 : vector<16x24xf32>
    %148 = vector.extract_strided_slice %147 {offsets = [0, 0], sizes = [16, 4], strides = [1, 1]} : vector<16x24xf32> to vector<16x4xf32>
    %149 = vector.extract_strided_slice %147 {offsets = [0, 8], sizes = [16, 4], strides = [1, 1]} : vector<16x24xf32> to vector<16x4xf32>
    %150 = vector.extract_strided_slice %147 {offsets = [0, 16], sizes = [16, 4], strides = [1, 1]} : vector<16x24xf32> to vector<16x4xf32>
    %cst_44 = arith.constant dense<0.000000e+00> : vector<16x16xf32>
    %151 = tpu.matmul %148, %149, %cst_44 {dimension_numbers = #tpu.dot_dimension_numbers<[1], [1], [0], [0], [0, 0, 1, 0], [], []>} : vector<16x4xf32>, vector<16x4xf32>, vector<16x16xf32> -> vector<16x16xf32>
    %cst_45 = arith.constant -1.000000e+04 : f32
    %152 = vector.broadcast %cst_45 : f32 to vector<16x16xf32>
    %153 = arith.select %17, %151, %152 : vector<16x16xi1>, vector<16x16xf32>
    %cst_46 = arith.constant dense<0xFF800000> : vector<16xf32>
    %154 = vector.multi_reduction <maximumf>, %153, %cst_46 [1] : vector<16x16xf32> to vector<16xf32>
    %155 = vector.shape_cast %154 : vector<16xf32> to vector<16x1xf32>
    %156 = vector.broadcast %155 : vector<16x1xf32> to vector<16x16xf32>
    %157 = arith.subf %153, %156 : vector<16x16xf32>
    %158 = math.exp %157 : vector<16x16xf32>
    %cst_47 = arith.constant dense<0.000000e+00> : vector<16xf32>
    %159 = vector.multi_reduction <add>, %158, %cst_47 [1] : vector<16x16xf32> to vector<16xf32>
    %160 = vector.shape_cast %159 : vector<16xf32> to vector<16x1xf32>
    %161 = vector.broadcast %160 : vector<16x1xf32> to vector<16x16xf32>
    %162 = arith.divf %158, %161 : vector<16x16xf32>
    %cst_48 = arith.constant dense<0.000000e+00> : vector<16x4xf32>
    %163 = tpu.matmul %162, %150, %cst_48 {dimension_numbers = #tpu.dot_dimension_numbers<[1], [0], [0], [1], [0, 0, 1, 1], [], []>} : vector<16x16xf32>, vector<16x4xf32>, vector<16x4xf32> -> vector<16x4xf32>
    %164 = vector.extract_strided_slice %147 {offsets = [0, 4], sizes = [16, 4], strides = [1, 1]} : vector<16x24xf32> to vector<16x4xf32>
    %165 = vector.extract_strided_slice %147 {offsets = [0, 12], sizes = [16, 4], strides = [1, 1]} : vector<16x24xf32> to vector<16x4xf32>
    %166 = vector.extract_strided_slice %147 {offsets = [0, 20], sizes = [16, 4], strides = [1, 1]} : vector<16x24xf32> to vector<16x4xf32>
    %cst_49 = arith.constant dense<0.000000e+00> : vector<16x16xf32>
    %167 = tpu.matmul %164, %165, %cst_49 {dimension_numbers = #tpu.dot_dimension_numbers<[1], [1], [0], [0], [0, 0, 1, 0], [], []>} : vector<16x4xf32>, vector<16x4xf32>, vector<16x16xf32> -> vector<16x16xf32>
    %cst_50 = arith.constant -1.000000e+04 : f32
    %168 = vector.broadcast %cst_50 : f32 to vector<16x16xf32>
    %169 = arith.select %17, %167, %168 : vector<16x16xi1>, vector<16x16xf32>
    %cst_51 = arith.constant dense<0xFF800000> : vector<16xf32>
    %170 = vector.multi_reduction <maximumf>, %169, %cst_51 [1] : vector<16x16xf32> to vector<16xf32>
    %171 = vector.shape_cast %170 : vector<16xf32> to vector<16x1xf32>
    %172 = vector.broadcast %171 : vector<16x1xf32> to vector<16x16xf32>
    %173 = arith.subf %169, %172 : vector<16x16xf32>
    %174 = math.exp %173 : vector<16x16xf32>
    %cst_52 = arith.constant dense<0.000000e+00> : vector<16xf32>
    %175 = vector.multi_reduction <add>, %174, %cst_52 [1] : vector<16x16xf32> to vector<16xf32>
    %176 = vector.shape_cast %175 : vector<16xf32> to vector<16x1xf32>
    %177 = vector.broadcast %176 : vector<16x1xf32> to vector<16x16xf32>
    %178 = arith.divf %174, %177 : vector<16x16xf32>
    %cst_53 = arith.constant dense<0.000000e+00> : vector<16x4xf32>
    %179 = tpu.matmul %178, %166, %cst_53 {dimension_numbers = #tpu.dot_dimension_numbers<[1], [0], [0], [1], [0, 0, 1, 1], [], []>} : vector<16x16xf32>, vector<16x4xf32>, vector<16x4xf32> -> vector<16x4xf32>
    %180 = tpu.concatenate %163, %179 in 1 : vector<16x4xf32>, vector<16x4xf32> -> vector<16x8xf32>
    %c144 = arith.constant 144 : index
    %c0_54 = arith.constant 0 : index
    %181 = vector.load %arg3[%c144, %c0_54] : memref<520x128xf32, #tpu.memory_space<vmem>>, vector<8x8xf32>
    %cst_55 = arith.constant dense<0.000000e+00> : vector<16x8xf32>
    %182 = tpu.matmul %180, %181, %cst_55 {dimension_numbers = #tpu.dot_dimension_numbers<[1], [0], [0], [1], [0, 0, 1, 1], [], []>} : vector<16x8xf32>, vector<8x8xf32>, vector<16x8xf32> -> vector<16x8xf32>
    %c152 = arith.constant 152 : index
    %c0_56 = arith.constant 0 : index
    %183 = vector.load %arg3[%c152, %c0_56] : memref<520x128xf32, #tpu.memory_space<vmem>>, vector<1x8xf32>
    %184 = vector.broadcast %183 : vector<1x8xf32> to vector<16x8xf32>
    %185 = arith.addf %182, %184 : vector<16x8xf32>
    %186 = arith.addf %142, %185 : vector<16x8xf32>
    %c160 = arith.constant 160 : index
    %c0_57 = arith.constant 0 : index
    %187 = vector.load %arg3[%c160, %c0_57] : memref<520x128xf32, #tpu.memory_space<vmem>>, vector<1x8xf32>
    %c168 = arith.constant 168 : index
    %c0_58 = arith.constant 0 : index
    %188 = vector.load %arg3[%c168, %c0_58] : memref<520x128xf32, #tpu.memory_space<vmem>>, vector<1x8xf32>
    %cst_59 = arith.constant dense<0.000000e+00> : vector<16xf32>
    %189 = vector.multi_reduction <add>, %186, %cst_59 [1] : vector<16x8xf32> to vector<16xf32>
    %190 = vector.shape_cast %189 : vector<16xf32> to vector<16x1xf32>
    %cst_60 = arith.constant 8.000000e+00 : f32
    %191 = vector.broadcast %cst_60 : f32 to vector<16x1xf32>
    %192 = arith.divf %190, %191 : vector<16x1xf32>
    %193 = vector.broadcast %192 : vector<16x1xf32> to vector<16x8xf32>
    %194 = arith.subf %186, %193 : vector<16x8xf32>
    %195 = arith.mulf %194, %194 : vector<16x8xf32>
    %cst_61 = arith.constant dense<0.000000e+00> : vector<16xf32>
    %196 = vector.multi_reduction <add>, %195, %cst_61 [1] : vector<16x8xf32> to vector<16xf32>
    %197 = vector.shape_cast %196 : vector<16xf32> to vector<16x1xf32>
    %cst_62 = arith.constant 8.000000e+00 : f32
    %198 = vector.broadcast %cst_62 : f32 to vector<16x1xf32>
    %199 = arith.divf %197, %198 : vector<16x1xf32>
    %200 = vector.broadcast %192 : vector<16x1xf32> to vector<16x8xf32>
    %201 = arith.subf %186, %200 : vector<16x8xf32>
    %cst_63 = arith.constant 9.99999974E-6 : f32
    %202 = vector.broadcast %cst_63 : f32 to vector<16x1xf32>
    %203 = arith.addf %199, %202 : vector<16x1xf32>
    %204 = math.rsqrt %203 : vector<16x1xf32>
    %205 = vector.broadcast %204 : vector<16x1xf32> to vector<16x8xf32>
    %206 = arith.mulf %201, %205 : vector<16x8xf32>
    %207 = vector.broadcast %187 : vector<1x8xf32> to vector<16x8xf32>
    %208 = arith.mulf %206, %207 : vector<16x8xf32>
    %209 = vector.broadcast %188 : vector<1x8xf32> to vector<16x8xf32>
    %210 = arith.addf %208, %209 : vector<16x8xf32>
    %211 = vector.broadcast %10 : vector<16x1xf32> to vector<16x8xf32>
    %212 = arith.mulf %210, %211 : vector<16x8xf32>
    %c192 = arith.constant 192 : index
    %c0_64 = arith.constant 0 : index
    %213 = vector.load %arg3[%c192, %c0_64] : memref<520x128xf32, #tpu.memory_space<vmem>>, vector<24x8xf32>
    %c216 = arith.constant 216 : index
    %c0_65 = arith.constant 0 : index
    %214 = vector.load %arg3[%c216, %c0_65] : memref<520x128xf32, #tpu.memory_space<vmem>>, vector<1x8xf32>
    %cst_66 = arith.constant 0.000000e+00 : f32
    %215 = vector.broadcast %cst_66 : f32 to vector<1x8xf32>
    %216 = tpu.concatenate %215, %212, %215 in 0 : vector<1x8xf32>, vector<16x8xf32>, vector<1x8xf32> -> vector<18x8xf32>
    %217 = vector.extract_strided_slice %216 {offsets = [0, 0], sizes = [16, 8], strides = [1, 1]} : vector<18x8xf32> to vector<16x8xf32>
    %218 = vector.extract_strided_slice %216 {offsets = [1, 0], sizes = [16, 8], strides = [1, 1]} : vector<18x8xf32> to vector<16x8xf32>
    %219 = vector.extract_strided_slice %216 {offsets = [2, 0], sizes = [16, 8], strides = [1, 1]} : vector<18x8xf32> to vector<16x8xf32>
    %220 = tpu.concatenate %217, %218, %219 in 1 : vector<16x8xf32>, vector<16x8xf32>, vector<16x8xf32> -> vector<16x24xf32>
    %cst_67 = arith.constant dense<0.000000e+00> : vector<16x8xf32>
    %221 = tpu.matmul %220, %213, %cst_67 {dimension_numbers = #tpu.dot_dimension_numbers<[1], [0], [0], [1], [0, 0, 1, 1], [], []>} : vector<16x24xf32>, vector<24x8xf32>, vector<16x8xf32> -> vector<16x8xf32>
    %222 = vector.broadcast %214 : vector<1x8xf32> to vector<16x8xf32>
    %223 = arith.addf %221, %222 : vector<16x8xf32>
    %cst_68 = arith.constant 0.000000e+00 : f32
    %224 = vector.broadcast %cst_68 : f32 to vector<16x8xf32>
    %225 = arith.maximumf %223, %224 : vector<16x8xf32>
    %226 = vector.broadcast %10 : vector<16x1xf32> to vector<16x8xf32>
    %227 = arith.mulf %225, %226 : vector<16x8xf32>
    %c224 = arith.constant 224 : index
    %c0_69 = arith.constant 0 : index
    %228 = vector.load %arg3[%c224, %c0_69] : memref<520x128xf32, #tpu.memory_space<vmem>>, vector<24x8xf32>
    %c248 = arith.constant 248 : index
    %c0_70 = arith.constant 0 : index
    %229 = vector.load %arg3[%c248, %c0_70] : memref<520x128xf32, #tpu.memory_space<vmem>>, vector<1x8xf32>
    %cst_71 = arith.constant 0.000000e+00 : f32
    %230 = vector.broadcast %cst_71 : f32 to vector<1x8xf32>
    %231 = tpu.concatenate %230, %227, %230 in 0 : vector<1x8xf32>, vector<16x8xf32>, vector<1x8xf32> -> vector<18x8xf32>
    %232 = vector.extract_strided_slice %231 {offsets = [0, 0], sizes = [16, 8], strides = [1, 1]} : vector<18x8xf32> to vector<16x8xf32>
    %233 = vector.extract_strided_slice %231 {offsets = [1, 0], sizes = [16, 8], strides = [1, 1]} : vector<18x8xf32> to vector<16x8xf32>
    %234 = vector.extract_strided_slice %231 {offsets = [2, 0], sizes = [16, 8], strides = [1, 1]} : vector<18x8xf32> to vector<16x8xf32>
    %235 = tpu.concatenate %232, %233, %234 in 1 : vector<16x8xf32>, vector<16x8xf32>, vector<16x8xf32> -> vector<16x24xf32>
    %cst_72 = arith.constant dense<0.000000e+00> : vector<16x8xf32>
    %236 = tpu.matmul %235, %228, %cst_72 {dimension_numbers = #tpu.dot_dimension_numbers<[1], [0], [0], [1], [0, 0, 1, 1], [], []>} : vector<16x24xf32>, vector<24x8xf32>, vector<16x8xf32> -> vector<16x8xf32>
    %237 = vector.broadcast %229 : vector<1x8xf32> to vector<16x8xf32>
    %238 = arith.addf %236, %237 : vector<16x8xf32>
    %239 = vector.broadcast %10 : vector<16x1xf32> to vector<16x8xf32>
    %240 = arith.mulf %238, %239 : vector<16x8xf32>
    %241 = arith.addf %210, %240 : vector<16x8xf32>
    %c176 = arith.constant 176 : index
    %c0_73 = arith.constant 0 : index
    %242 = vector.load %arg3[%c176, %c0_73] : memref<520x128xf32, #tpu.memory_space<vmem>>, vector<1x8xf32>
    %c184 = arith.constant 184 : index
    %c0_74 = arith.constant 0 : index
    %243 = vector.load %arg3[%c184, %c0_74] : memref<520x128xf32, #tpu.memory_space<vmem>>, vector<1x8xf32>
    %cst_75 = arith.constant dense<0.000000e+00> : vector<16xf32>
    %244 = vector.multi_reduction <add>, %241, %cst_75 [1] : vector<16x8xf32> to vector<16xf32>
    %245 = vector.shape_cast %244 : vector<16xf32> to vector<16x1xf32>
    %cst_76 = arith.constant 8.000000e+00 : f32
    %246 = vector.broadcast %cst_76 : f32 to vector<16x1xf32>
    %247 = arith.divf %245, %246 : vector<16x1xf32>
    %248 = vector.broadcast %247 : vector<16x1xf32> to vector<16x8xf32>
    %249 = arith.subf %241, %248 : vector<16x8xf32>
    %250 = arith.mulf %249, %249 : vector<16x8xf32>
    %cst_77 = arith.constant dense<0.000000e+00> : vector<16xf32>
    %251 = vector.multi_reduction <add>, %250, %cst_77 [1] : vector<16x8xf32> to vector<16xf32>
    %252 = vector.shape_cast %251 : vector<16xf32> to vector<16x1xf32>
    %cst_78 = arith.constant 8.000000e+00 : f32
    %253 = vector.broadcast %cst_78 : f32 to vector<16x1xf32>
    %254 = arith.divf %252, %253 : vector<16x1xf32>
    %255 = vector.broadcast %247 : vector<16x1xf32> to vector<16x8xf32>
    %256 = arith.subf %241, %255 : vector<16x8xf32>
    %cst_79 = arith.constant 9.99999974E-6 : f32
    %257 = vector.broadcast %cst_79 : f32 to vector<16x1xf32>
    %258 = arith.addf %254, %257 : vector<16x1xf32>
    %259 = math.rsqrt %258 : vector<16x1xf32>
    %260 = vector.broadcast %259 : vector<16x1xf32> to vector<16x8xf32>
    %261 = arith.mulf %256, %260 : vector<16x8xf32>
    %262 = vector.broadcast %242 : vector<1x8xf32> to vector<16x8xf32>
    %263 = arith.mulf %261, %262 : vector<16x8xf32>
    %264 = vector.broadcast %243 : vector<1x8xf32> to vector<16x8xf32>
    %265 = arith.addf %263, %264 : vector<16x8xf32>
    %266 = vector.broadcast %10 : vector<16x1xf32> to vector<16x8xf32>
    %267 = arith.mulf %265, %266 : vector<16x8xf32>
    %268 = arith.addf %267, %4 : vector<16x8xf32>
    %c256 = arith.constant 256 : index
    %c0_80 = arith.constant 0 : index
    %269 = vector.load %arg3[%c256, %c0_80] : memref<520x128xf32, #tpu.memory_space<vmem>>, vector<8x16xf32>
    %cst_81 = arith.constant dense<0.000000e+00> : vector<16x16xf32>
    %270 = tpu.matmul %268, %269, %cst_81 {dimension_numbers = #tpu.dot_dimension_numbers<[1], [0], [0], [1], [0, 0, 1, 1], [], []>} : vector<16x8xf32>, vector<8x16xf32>, vector<16x16xf32> -> vector<16x16xf32>
    %c264 = arith.constant 264 : index
    %c0_82 = arith.constant 0 : index
    %271 = vector.load %arg3[%c264, %c0_82] : memref<520x128xf32, #tpu.memory_space<vmem>>, vector<1x16xf32>
    %272 = vector.broadcast %271 : vector<1x16xf32> to vector<16x16xf32>
    %273 = arith.addf %270, %272 : vector<16x16xf32>
    %274 = vector.broadcast %10 : vector<16x1xf32> to vector<16x16xf32>
    %275 = arith.mulf %273, %274 : vector<16x16xf32>
    %cst_83 = arith.constant 0.000000e+00 : f32
    %276 = vector.broadcast %cst_83 : f32 to vector<16x16xf32>
    %c272 = arith.constant 272 : index
    %c0_84 = arith.constant 0 : index
    %277 = vector.load %arg3[%c272, %c0_84] : memref<520x128xf32, #tpu.memory_space<vmem>>, vector<80x32xf32>
    %c352 = arith.constant 352 : index
    %c0_85 = arith.constant 0 : index
    %278 = vector.load %arg3[%c352, %c0_85] : memref<520x128xf32, #tpu.memory_space<vmem>>, vector<1x32xf32>
    %cst_86 = arith.constant 0.000000e+00 : f32
    %279 = vector.broadcast %cst_86 : f32 to vector<2x16xf32>
    %280 = tpu.concatenate %279, %275, %279 in 0 : vector<2x16xf32>, vector<16x16xf32>, vector<2x16xf32> -> vector<20x16xf32>
    %281 = vector.extract_strided_slice %280 {offsets = [0, 0], sizes = [16, 16], strides = [1, 1]} : vector<20x16xf32> to vector<16x16xf32>
    %282 = vector.extract_strided_slice %280 {offsets = [1, 0], sizes = [16, 16], strides = [1, 1]} : vector<20x16xf32> to vector<16x16xf32>
    %283 = vector.extract_strided_slice %280 {offsets = [2, 0], sizes = [16, 16], strides = [1, 1]} : vector<20x16xf32> to vector<16x16xf32>
    %284 = vector.extract_strided_slice %280 {offsets = [3, 0], sizes = [16, 16], strides = [1, 1]} : vector<20x16xf32> to vector<16x16xf32>
    %285 = vector.extract_strided_slice %280 {offsets = [4, 0], sizes = [16, 16], strides = [1, 1]} : vector<20x16xf32> to vector<16x16xf32>
    %286 = tpu.concatenate %281, %282, %283, %284, %285 in 1 : vector<16x16xf32>, vector<16x16xf32>, vector<16x16xf32>, vector<16x16xf32>, vector<16x16xf32> -> vector<16x80xf32>
    %cst_87 = arith.constant dense<0.000000e+00> : vector<16x32xf32>
    %287 = tpu.matmul %286, %277, %cst_87 {dimension_numbers = #tpu.dot_dimension_numbers<[1], [0], [0], [1], [0, 0, 1, 1], [], []>} : vector<16x80xf32>, vector<80x32xf32>, vector<16x32xf32> -> vector<16x32xf32>
    %288 = vector.broadcast %278 : vector<1x32xf32> to vector<16x32xf32>
    %289 = arith.addf %287, %288 : vector<16x32xf32>
    %290 = vector.extract_strided_slice %289 {offsets = [0, 0], sizes = [16, 16], strides = [1, 1]} : vector<16x32xf32> to vector<16x16xf32>
    %291 = math.tanh %290 : vector<16x16xf32>
    %292 = vector.extract_strided_slice %289 {offsets = [0, 16], sizes = [16, 16], strides = [1, 1]} : vector<16x32xf32> to vector<16x16xf32>
    %293 = arith.negf %292 : vector<16x16xf32>
    %294 = math.exp %293 : vector<16x16xf32>
    %cst_88 = arith.constant 1.000000e+00 : f32
    %295 = vector.broadcast %cst_88 : f32 to vector<16x16xf32>
    %296 = arith.addf %295, %294 : vector<16x16xf32>
    %297 = arith.divf %295, %296 : vector<16x16xf32>
    %298 = arith.mulf %291, %297 : vector<16x16xf32>
    %c360 = arith.constant 360 : index
    %c0_89 = arith.constant 0 : index
    %299 = vector.load %arg3[%c360, %c0_89] : memref<520x128xf32, #tpu.memory_space<vmem>>, vector<16x32xf32>
    %cst_90 = arith.constant dense<0.000000e+00> : vector<16x32xf32>
    %300 = tpu.matmul %298, %299, %cst_90 {dimension_numbers = #tpu.dot_dimension_numbers<[1], [0], [0], [1], [0, 0, 1, 1], [], []>} : vector<16x16xf32>, vector<16x32xf32>, vector<16x32xf32> -> vector<16x32xf32>
    %c376 = arith.constant 376 : index
    %c0_91 = arith.constant 0 : index
    %301 = vector.load %arg3[%c376, %c0_91] : memref<520x128xf32, #tpu.memory_space<vmem>>, vector<1x32xf32>
    %302 = vector.broadcast %301 : vector<1x32xf32> to vector<16x32xf32>
    %303 = arith.addf %300, %302 : vector<16x32xf32>
    %304 = vector.extract_strided_slice %303 {offsets = [0, 0], sizes = [16, 16], strides = [1, 1]} : vector<16x32xf32> to vector<16x16xf32>
    %305 = arith.addf %275, %304 : vector<16x16xf32>
    %306 = vector.broadcast %10 : vector<16x1xf32> to vector<16x16xf32>
    %307 = arith.mulf %305, %306 : vector<16x16xf32>
    %308 = vector.extract_strided_slice %303 {offsets = [0, 16], sizes = [16, 16], strides = [1, 1]} : vector<16x32xf32> to vector<16x16xf32>
    %309 = arith.addf %276, %308 : vector<16x16xf32>
    %c384 = arith.constant 384 : index
    %c0_92 = arith.constant 0 : index
    %310 = vector.load %arg3[%c384, %c0_92] : memref<520x128xf32, #tpu.memory_space<vmem>>, vector<80x32xf32>
    %c464 = arith.constant 464 : index
    %c0_93 = arith.constant 0 : index
    %311 = vector.load %arg3[%c464, %c0_93] : memref<520x128xf32, #tpu.memory_space<vmem>>, vector<1x32xf32>
    %cst_94 = arith.constant 0.000000e+00 : f32
    %312 = vector.broadcast %cst_94 : f32 to vector<2x16xf32>
    %313 = tpu.concatenate %312, %307, %312 in 0 : vector<2x16xf32>, vector<16x16xf32>, vector<2x16xf32> -> vector<20x16xf32>
    %314 = vector.extract_strided_slice %313 {offsets = [0, 0], sizes = [16, 16], strides = [1, 1]} : vector<20x16xf32> to vector<16x16xf32>
    %315 = vector.extract_strided_slice %313 {offsets = [1, 0], sizes = [16, 16], strides = [1, 1]} : vector<20x16xf32> to vector<16x16xf32>
    %316 = vector.extract_strided_slice %313 {offsets = [2, 0], sizes = [16, 16], strides = [1, 1]} : vector<20x16xf32> to vector<16x16xf32>
    %317 = vector.extract_strided_slice %313 {offsets = [3, 0], sizes = [16, 16], strides = [1, 1]} : vector<20x16xf32> to vector<16x16xf32>
    %318 = vector.extract_strided_slice %313 {offsets = [4, 0], sizes = [16, 16], strides = [1, 1]} : vector<20x16xf32> to vector<16x16xf32>
    %319 = tpu.concatenate %314, %315, %316, %317, %318 in 1 : vector<16x16xf32>, vector<16x16xf32>, vector<16x16xf32>, vector<16x16xf32>, vector<16x16xf32> -> vector<16x80xf32>
    %cst_95 = arith.constant dense<0.000000e+00> : vector<16x32xf32>
    %320 = tpu.matmul %319, %310, %cst_95 {dimension_numbers = #tpu.dot_dimension_numbers<[1], [0], [0], [1], [0, 0, 1, 1], [], []>} : vector<16x80xf32>, vector<80x32xf32>, vector<16x32xf32> -> vector<16x32xf32>
    %321 = vector.broadcast %311 : vector<1x32xf32> to vector<16x32xf32>
    %322 = arith.addf %320, %321 : vector<16x32xf32>
    %323 = vector.extract_strided_slice %322 {offsets = [0, 0], sizes = [16, 16], strides = [1, 1]} : vector<16x32xf32> to vector<16x16xf32>
    %324 = math.tanh %323 : vector<16x16xf32>
    %325 = vector.extract_strided_slice %322 {offsets = [0, 16], sizes = [16, 16], strides = [1, 1]} : vector<16x32xf32> to vector<16x16xf32>
    %326 = arith.negf %325 : vector<16x16xf32>
    %327 = math.exp %326 : vector<16x16xf32>
    %cst_96 = arith.constant 1.000000e+00 : f32
    %328 = vector.broadcast %cst_96 : f32 to vector<16x16xf32>
    %329 = arith.addf %328, %327 : vector<16x16xf32>
    %330 = arith.divf %328, %329 : vector<16x16xf32>
    %331 = arith.mulf %324, %330 : vector<16x16xf32>
    %c472 = arith.constant 472 : index
    %c0_97 = arith.constant 0 : index
    %332 = vector.load %arg3[%c472, %c0_97] : memref<520x128xf32, #tpu.memory_space<vmem>>, vector<16x32xf32>
    %cst_98 = arith.constant dense<0.000000e+00> : vector<16x32xf32>
    %333 = tpu.matmul %331, %332, %cst_98 {dimension_numbers = #tpu.dot_dimension_numbers<[1], [0], [0], [1], [0, 0, 1, 1], [], []>} : vector<16x16xf32>, vector<16x32xf32>, vector<16x32xf32> -> vector<16x32xf32>
    %c488 = arith.constant 488 : index
    %c0_99 = arith.constant 0 : index
    %334 = vector.load %arg3[%c488, %c0_99] : memref<520x128xf32, #tpu.memory_space<vmem>>, vector<1x32xf32>
    %335 = vector.broadcast %334 : vector<1x32xf32> to vector<16x32xf32>
    %336 = arith.addf %333, %335 : vector<16x32xf32>
    %337 = vector.extract_strided_slice %336 {offsets = [0, 0], sizes = [16, 16], strides = [1, 1]} : vector<16x32xf32> to vector<16x16xf32>
    %338 = arith.addf %309, %337 : vector<16x16xf32>
    %339 = vector.broadcast %10 : vector<16x1xf32> to vector<16x16xf32>
    %340 = arith.mulf %338, %339 : vector<16x16xf32>
    %c496 = arith.constant 496 : index
    %c0_100 = arith.constant 0 : index
    %341 = vector.load %arg3[%c496, %c0_100] : memref<520x128xf32, #tpu.memory_space<vmem>>, vector<16x8xf32>
    %cst_101 = arith.constant dense<0.000000e+00> : vector<16x8xf32>
    %342 = tpu.matmul %340, %341, %cst_101 {dimension_numbers = #tpu.dot_dimension_numbers<[1], [0], [0], [1], [0, 0, 1, 1], [], []>} : vector<16x16xf32>, vector<16x8xf32>, vector<16x8xf32> -> vector<16x8xf32>
    %c512 = arith.constant 512 : index
    %c0_102 = arith.constant 0 : index
    %343 = vector.load %arg3[%c512, %c0_102] : memref<520x128xf32, #tpu.memory_space<vmem>>, vector<1x8xf32>
    %344 = vector.broadcast %343 : vector<1x8xf32> to vector<16x8xf32>
    %345 = arith.addf %342, %344 : vector<16x8xf32>
    %346 = vector.broadcast %10 : vector<16x1xf32> to vector<16x8xf32>
    %347 = arith.mulf %345, %346 : vector<16x8xf32>
    %348 = vector.broadcast %10 : vector<16x1xf32> to vector<16x8xf32>
    %349 = arith.mulf %5, %348 : vector<16x8xf32>
    %350 = arith.addf %347, %349 : vector<16x8xf32>
    %351 = tpu.concatenate %268, %350 in 1 : vector<16x8xf32>, vector<16x8xf32> -> vector<16x16xf32>
    %c0_103 = arith.constant 0 : index
    %c0_104 = arith.constant 0 : index
    %c0_105 = arith.constant 0 : index
    %352 = vector.load %arg4[%c0_103, %c0_104, %c0_105] : memref<1x16x16xf32, #tpu.memory_space<vmem>>, vector<1x16x16xf32>
    %353 = vector.shape_cast %352 : vector<1x16x16xf32> to vector<16x16xf32>
    %354 = vector.shape_cast %351 : vector<16x16xf32> to vector<1x16x16xf32>
    tpu.vector_store %arg4[%c0_103, %c0_104, %c0_105], %354 {strides = array<i32>} : memref<1x16x16xf32, #tpu.memory_space<vmem>>, vector<1x16x16xf32>,
    return
  }
  func.func @transform_0(%arg0: i32, %arg1: memref<2xi32, #tpu.memory_space<smem>>) -> (i32, i32, i32) {
    %c0_i32 = arith.constant 0 : i32
    %c0_i32_0 = arith.constant 0 : i32
    %c0_i32_1 = arith.constant 0 : i32
    return %arg0, %c0_i32, %c0_i32_0 : i32, i32, i32
  }
  func.func @transform_1(%arg0: i32, %arg1: memref<2xi32, #tpu.memory_space<smem>>) -> (i32, i32) {
    %c0_i32 = arith.constant 0 : i32
    %c0_i32_0 = arith.constant 0 : i32
    %c0_i32_1 = arith.constant 0 : i32
    return %c0_i32, %c0_i32_0 : i32, i32
  }
  func.func @transform_2(%arg0: i32, %arg1: memref<2xi32, #tpu.memory_space<smem>>) -> (i32, i32, i32) {
    %c0_i32 = arith.constant 0 : i32
    %c0_i32_0 = arith.constant 0 : i32
    %c0_i32_1 = arith.constant 0 : i32
    return %arg0, %c0_i32, %c0_i32_0 : i32, i32, i32
  }
}

</mosaic_0001>

<llo_original>
// kernel: tpu_custom_call.1
$region0: #{tpu_custom_call.1}
  #allocation0 [shape = 'u32[]', space=smem, size = 0x4, offset = 0x4, fixed_abs, tag = 'smem constant byte address 0x4 - core index']
  #allocation1 [shape = 'u32[72,128]{1,0:T(1,128)}', space=vmem, size = 0x9000, scoped, tag = 'internal scratch']
  #allocation2 [shape = 's32[1]{0}', space=sflag, size = 0x4, scoped, tag = 'scoped memory for tpu_custom_call.1']
  #allocation3 [shape = 'u8[512]{0}', space=smem, size = 0x200, scoped, tag = 'prefetched SMEM operand 0']
  %s0 = inlined_call_operand.hbm [shape: s32[2], index: 0, kind: input, shape index: {}]
  %s1 = inlined_call_operand.hbm [shape: f32[2,16,16], index: 1, kind: input, shape index: {}]
  %s2 = inlined_call_operand.hbm [shape: f32[520,128], index: 2, kind: input, shape index: {}]
  %s3 = inlined_call_operand.hbm [shape: f32[2,16,16], index: 3, kind: output, shape index: {}]
  %s4 = sld [smem:[#allocation0]]
  $region49: #{tpu_custom_call.1} parent=0
    _
  %s6 = ssub.s32 1, %s4
  %s7 = scalar_select 0, %s6, %s4
  %s9 = sshll.u32 %s0, 4
  %s10 = int_to_ptr.hbm [resolvable:$true] %s9
  %12 = dma.hbm_to_smem %s10, 16, [#allocation3], [#allocation2]
  %14 = dma.done [#allocation2], 16
  %15 = sfence
  $region1: #{tpu_custom_call.1} parent=0
    #allocation4 [shape = 'u8[16384]{0}', space=vmem, size = 0x4000, scoped, tag = 'input window, operand 1']
    #allocation5 [shape = 's32[2]{0}', space=sflag, size = 0x8, scoped, tag = 'scoped memory for tpu_custom_call.1']
    #allocation6 [shape = 's32[2]{0}', space=sflag, size = 0x8, scoped, tag = 'scoped memory for tpu_custom_call.1']
    #allocation7 [shape = 'u8[266240]{0}', space=vmem, size = 0x41000, scoped, tag = 'input window, operand 2, single buffered']
    #allocation8 [shape = 's32[1]{0}', space=sflag, size = 0x4, scoped, tag = 'scoped memory for tpu_custom_call.1']
    #allocation9 [shape = 'u8[16384]{0}', space=vmem, size = 0x4000, scoped, tag = 'output window, operand 0']
    %16 = vsyncpa [#allocation5], 0
    %s17 = scalar_lea.sflag [#allocation5], 1
    %18 = vsyncpa %s17, 0
    %19 = vsyncpa [#allocation8], 0
    %20 = vsyncpa [#allocation6], 0
    %s21 = scalar_lea.sflag [#allocation6], 1
    %22 = vsyncpa %s21, 0
    loop: start=0, step=1, limit=4
    $region2: #{tpu_custom_call.1} parent=1 // loop_pre_header
      _
    $region3: #{tpu_custom_call.1} parent=1 // loop_header
      %s24 = sphi 0, %s28
      %p25 = scmp.ge.s32.totalorder %s24, 4
      %s34 = sphi 0, %s36
      %s37 = sphi 0, %s34
      %s38 = sphi 0, %s37
      %s54 = sphi 0, %s38
      %s58 = sphi 0, %s58
      %s60 = sphi 0, %s58
      %s61 = sphi 0, %s60
      %s75 = sphi 0, %s61
      %s81 = sphi 0, %s83
      %s84 = sphi 0, %s81
      %s85 = sphi 0, %s84
      %s101 = sphi 0, %s85
    $region4: #{tpu_custom_call.1} parent=1 // loop_header_branch
      %27 = sbr.rel (%p25) target = $region8
    $region5: #{tpu_custom_call.1} parent=1 // loop_body
      %s29 = ssub.s32 %s24, 1
      %s30 = ssub.s32 %s24, 2
      %s31 = sadd.s32 %s24, 1
      %s32 = ssub.s32 %s24, %s31
      %p33 = scmp.eq.s32.totalorder %s32, 0
      %s35 = sadd.s32 %s34, 1
      %s36 = scalar_select %p33, %s34, %s35
      %p39 = pneg %p33
      %p40 = scmp.eq.s32.totalorder %s24, 1
      %p41 = por %p39, %p40
      %p42 = scmp.ne.s32.totalorder %s34, %s37
      %p43 = scmp.eq.s32.totalorder %s24, 0
      %p44 = por %p42, %p43
      %p45 = scmp.ne.s32.totalorder %s34, %s37
      %p46 = scmp.eq.s32.totalorder %s29, 1
      %p47 = por %p45, %p46
      %p48 = scmp.ne.s32.totalorder %s37, %s38
      %p49 = scmp.eq.s32.totalorder %s29, 0
      %p50 = por %p48, %p49
      %p51 = scmp.ne.s32.totalorder %s37, %s38
      %p52 = scmp.eq.s32.totalorder %s30, 1
      %p53 = por %p51, %p52
      %p55 = scmp.ne.s32.totalorder %s38, %s54
      %p56 = scmp.eq.s32.totalorder %s30, 0
      %p57 = por %p55, %p56
      %s59 = sadd.s32 %s58, 1
      %p62 = scmp.eq.s32.totalorder %s24, 1
      %p63 = scmp.ne.s32.totalorder %s58, %s60
      %p64 = scmp.eq.s32.totalorder %s24, 0
      %p65 = por %p63, %p64
      %p66 = scmp.ne.s32.totalorder %s58, %s60
      %p67 = scmp.eq.s32.totalorder %s29, 1
      %p68 = por %p66, %p67
      %p69 = scmp.ne.s32.totalorder %s60, %s61
      %p70 = scmp.eq.s32.totalorder %s29, 0
      %p71 = por %p69, %p70
      %p72 = scmp.ne.s32.totalorder %s60, %s61
      %p73 = scmp.eq.s32.totalorder %s30, 1
      %p74 = por %p72, %p73
      %p76 = scmp.ne.s32.totalorder %s61, %s75
      %p77 = scmp.eq.s32.totalorder %s30, 0
      %p78 = por %p76, %p77
      %s79 = ssub.s32 %s24, %s31
      %p80 = scmp.eq.s32.totalorder %s79, 0
      %s82 = sadd.s32 %s81, 1
      %s83 = scalar_select %p80, %s81, %s82
      %p86 = pneg %p80
      %p87 = scmp.eq.s32.totalorder %s24, 1
      %p88 = por %p86, %p87
      %p89 = scmp.ne.s32.totalorder %s81, %s84
      %p90 = scmp.eq.s32.totalorder %s24, 0
      %p91 = por %p89, %p90
      %p92 = scmp.ne.s32.totalorder %s81, %s84
      %p93 = scmp.eq.s32.totalorder %s29, 1
      %p94 = por %p92, %p93
      %p95 = scmp.ne.s32.totalorder %s84, %s85
      %p96 = scmp.eq.s32.totalorder %s29, 0
      %p97 = por %p95, %p96
      %p98 = scmp.ne.s32.totalorder %s84, %s85
      %p99 = scmp.eq.s32.totalorder %s30, 1
      %p100 = por %p98, %p99
      %p102 = scmp.ne.s32.totalorder %s85, %s101
      %p103 = scmp.eq.s32.totalorder %s30, 0
      %p104 = por %p102, %p103
      %p105 = scmp.le.s32.totalorder 1, %s24
      %p106 = scmp.lt.s32.totalorder %s24, 3
      %p107 = pnand %p105, %p106
      %p108 = pneg %p107
      // Predicated region
      $region9: #{tpu_custom_call.1} parent=5 // pred_check
        _
      $region10: #{tpu_custom_call.1} parent=5 // pred_check_branch
        %110 = sbr.rel (%p107) target = $region12
      $region11: #{tpu_custom_call.1} parent=5 // pred_region
        %s111 = ssub.s32 %s24, 1
        // Predicated region
        $region13: #{tpu_custom_call.1} parent=11 // pred_check
          %p112 = pneg %p71
        $region14: #{tpu_custom_call.1} parent=11 // pred_check_branch
          %114 = sbr.rel (%p112) target = $region16
        $region15: #{tpu_custom_call.1} parent=11 // pred_region
          %116 = vsyncadd [#allocation8], 0
          %s117 = sshll.u32 %s2, 4
          %s118 = int_to_ptr.hbm [resolvable:$true] %s117
          %s119 = sshll.u32 [#allocation7], 4
          %s120 = int_to_ptr.vmem [resolvable:$true] %s119
          %125 = dma.hbm_to_vmem [thread:$0]  %s118, 8320, %s120, [#allocation8], 128, 128, 8
        $region16: #{tpu_custom_call.1} parent=11 // pred_fallthru
          _
      $region12: #{tpu_custom_call.1} parent=5 // pred_fallthru
        _
      %p126 = scmp.lt.s32.totalorder %s24, 2
      // Predicated region
      $region17: #{tpu_custom_call.1} parent=5 // pred_check
        %p127 = pneg %p126
      $region18: #{tpu_custom_call.1} parent=5 // pred_check_branch
        %129 = sbr.rel (%p127) target = $region20
      $region19: #{tpu_custom_call.1} parent=5 // pred_region
        // Predicated region
        $region21: #{tpu_custom_call.1} parent=19 // pred_check
          %p130 = pneg %p44
        $region22: #{tpu_custom_call.1} parent=19 // pred_check_branch
          %132 = sbr.rel (%p130) target = $region24
        $region23: #{tpu_custom_call.1} parent=19 // pred_region
          %s133 = sand.u32 %s34, 1
          %s134 = scalar_lea.sflag [#allocation5], %s133
          %s135 = sand.u32 %s34, 1
          %s136 = smul.addr %s135, 16
          %s137 = scalar_lea.vmem [#allocation4], %s136
          %139 = vsyncadd %s134, 0
          %s140 = smul.addr %s24, 2
          %s141 = smul.addr %s140, 8
          %s142 = scalar_lea.hbm %s1, %s141
          %s143 = sshll.u32 %s142, 4
          %s144 = int_to_ptr.hbm [resolvable:$true] %s143
          %s145 = sshll.u32 %s137, 4
          %s146 = int_to_ptr.vmem [resolvable:$true] %s145
          %151 = dma.hbm_to_vmem [thread:$0]  %s144, 256, %s146, %s134, 128, 128, 8
        $region24: #{tpu_custom_call.1} parent=19 // pred_fallthru
          _
      $region20: #{tpu_custom_call.1} parent=5 // pred_fallthru
        _
      %p152 = scmp.le.s32.totalorder 1, %s24
      %p153 = scmp.lt.s32.totalorder %s24, 3
      %p154 = pnand %p152, %p153
      %p155 = pneg %p154
      // Predicated region
      $region25: #{tpu_custom_call.1} parent=5 // pred_check
        _
      $region26: #{tpu_custom_call.1} parent=5 // pred_check_branch
        %157 = sbr.rel (%p154) target = $region28
      $region27: #{tpu_custom_call.1} parent=5 // pred_region
        %s158 = ssub.s32 %s24, 1
        %s159 = sand.u32 %s37, 1
        %s160 = scalar_lea.sflag [#allocation5], %s159
        %s161 = sand.u32 %s37, 1
        %s162 = smul.addr %s161, 16
        %s163 = scalar_lea.vmem [#allocation4], %s162
        // Predicated region
        $region29: #{tpu_custom_call.1} parent=27 // pred_check
          %p164 = pneg %p50
        $region30: #{tpu_custom_call.1} parent=27 // pred_check_branch
          %166 = sbr.rel (%p164) target = $region32
        $region31: #{tpu_custom_call.1} parent=27 // pred_region
          %168 = dma.done %s160, 256
        $region32: #{tpu_custom_call.1} parent=27 // pred_fallthru
          _
        // Predicated region
        $region33: #{tpu_custom_call.1} parent=27 // pred_check
          %p169 = pneg %p71
        $region34: #{tpu_custom_call.1} parent=27 // pred_check_branch
          %171 = sbr.rel (%p169) target = $region36
        $region35: #{tpu_custom_call.1} parent=27 // pred_region
          %173 = dma.done [#allocation8], 8320
        $region36: #{tpu_custom_call.1} parent=27 // pred_fallthru
          _
        %s174 = sand.u32 %s37, 1
        %s175 = scalar_lea.sflag [#allocation5], %s174
        %s176 = sand.u32 %s37, 1
        %s177 = smul.addr %s176, 16
        %s178 = scalar_lea.vmem [#allocation4], %s177
        %p179 = pneg %p50
        %p180 = pneg %p47
        %p181 = pneg %p71
        %p182 = pneg %p68
        %p183 = pneg %p97
        %p184 = pneg %p94
        %s185 = sand.u32 %s84, 1
        %s186 = scalar_lea.sflag [#allocation6], %s185
        %s187 = sand.u32 %s84, 1
        %s188 = smul.addr %s187, 16
        %s189 = scalar_lea.vmem [#allocation9], %s188
        %s190 = sld [smem:[#allocation3 + %s29]]
        %v191 = vld [vmem:[%s163] sm:$0xff]
        %v192 = vld [vmem:[%s163 + $0x8] sm:$0xff]
        %v193 = vlaneseq
        %v194 = vshrl.u32 %v193, 7
        %v195 = vadd.s32 %v194, 8
        %v196 = vstv %s190
        %vm197 = vcmp.lt.s32.totalorder %v194, %v196
        %vm198 = vcmp.lt.s32.totalorder %v195, %v196
        %v199 = vsel %vm197, 1, 0
        %v200 = vsel %vm198, 1, 0
        %v201 = vcvt.s32.f32 %v199
        %v202 = vcvt.s32.f32 %v200
        %v203 = vlaneseq
        %v204 = vand.u32 %v203, 127
        %vm205 = vcmp.lt.s32.totalorder %v204, %v196
        %vm206 = vmand %vm197, %vm205
        %vm207 = vmand %vm198, %vm205
        %v208 = vmul.f32 %v191, %v201
        %v209 = vmul.f32 %v192, %v202
        %v210 = vld [vmem:[#allocation7] sm:$0xff]
        %v211 = vld [vmem:[#allocation7 + $0x8] sm:$0x1]
        %v212 = vperm.slane %v211, 0
        %vm213 = vcmask 64512
        %v215 = vsel %vm213, %v208, 0
        %v218 = vsel %vm213, %v209, 0
        %220 = vmatpush.msra.mxu0 0.0
        %221 = vmatpush.msra.mxu0 0.0
        %222 = vmatpush.msra.mxu0 0.0
        %223 = vmatpush.msra.mxu0 0.0
        %224 = vmatpush.msra.mxu0 0.0
        %225 = vmatpush.msra.mxu0 0.0
        %226 = vmatpush.msra.mxu0 0.0
        %227 = vmatpush.msra.mxu0 0.0
        %228 = vmatpush.msra.mxu0 0.0
        %229 = vmatpush.msra.mxu0 0.0
        %230 = vmatpush.msra.mxu0 0.0
        %231 = vmatpush.msra.mxu0 0.0
        %232 = vmatpush.msra.mxu0 0.0
        %233 = vmatpush.msra.mxu0 0.0
        %234 = vmatpush.msra.mxu0 0.0
        %235 = vmatpush.msra.mxu0 %v210
        %236 = vmatmul.f32.gmra.mxu0 %v215
        %v237 = vpop.f32.mrf.mxu0
        %v238 = vadd.f32 %v212, %v237
        %239 = vmatmul.f32.gmra.mxu0 %v218
        %v240 = vpop.f32.mrf.mxu0
        %v241 = vadd.f32 %v212, %v240
        %242 = vdwg.mxu0
        %245 = vrot.lane.b32.xlu0 %v238, 120
        %v246 = vpop.permute.xlu0 %245
        %247 = vrot.lane.b32.xlu0 %v241, 120
        %v248 = vpop.permute.xlu0 %247
        %vm249 = vcmask 31744
        %v250 = vsel %vm249, %v238, 0
        %v252 = vsel %vm249, %v241, 0
        %v254 = vsel %vm249, %v246, 0
        %v256 = vsel %vm249, %v248, 0
        %258 = vmatpush.xpose.msra.mxu0 0.0
        %259 = vmatpush.xpose.msra.mxu0 0.0
        %260 = vmatpush.xpose.msra.mxu0 0.0
        %261 = vmatpush.xpose.msra.mxu0 0.0
        %262 = vmatpush.xpose.msra.mxu0 0.0
        %263 = vmatpush.xpose.msra.mxu0 0.0
        %264 = vmatpush.xpose.msra.mxu0 0.0
        %265 = vmatpush.xpose.msra.mxu0 0.0
        %266 = vmatpush.xpose.msra.mxu0 0.0
        %267 = vmatpush.xpose.msra.mxu0 0.0
        %268 = vmatpush.xpose.msra.mxu0 0.0
        %269 = vmatpush.xpose.msra.mxu0 0.0
        %270 = vmatpush.xpose.msra.mxu0 0.0
        %271 = vmatpush.xpose.msra.mxu0 0.0
        %272 = vmatpush.xpose.msra.mxu0 %v256
        %273 = vmatpush.xpose.msra.mxu0 %v254
        %274 = vmatmul.f32.gmra.mxu0 %v250
        %v275 = vpop.f32.mrf.mxu0
        %v276 = vadd.f32 0.0, %v275
        %277 = vmatmul.f32.gmra.mxu0 %v252
        %v278 = vpop.f32.mrf.mxu0
        %v279 = vadd.f32 0.0, %v278
        %280 = vdwg.mxu0
        %v281 = vsel %vm206, %v276, -10000.0
        %v282 = vsel %vm207, %v279, -10000.0
        %vm283 = vcmask 130048
        %v284 = vsel %vm283, %v281, -inf
        %285 = vmax.xlane.f32.xlu0 %v284
        %v286 = vpop.xlane.xlu0 %285
        %v287 = vsel %vm283, %v282, -inf
        %288 = vmax.xlane.f32.xlu0 %v287
        %v289 = vpop.xlane.xlu0 %288
        %v290 = vsub.f32 %v281, %v286
        %v291 = vsub.f32 %v282, %v289
        %v292 = vmul.f32 %v290, 1.442695
        %v293 = vpow.pop %v292
        %v294 = vmul.f32 %v291, 1.442695
        %v295 = vpow.pop %v294
        %v296 = vsel %vm283, %v293, 0.0
        %297 = vadd.xlane.f32.xlu0 %v296
        %v298 = vpop.xlane.xlu0 %297
        %v299 = vsel %vm283, %v295, 0.0
        %300 = vadd.xlane.f32.xlu0 %v299
        %v301 = vpop.xlane.xlu0 %300
        %v302 = vrcp.pop %v298
        %v303 = vmul.f32 %v298, %v302
        %v304 = vsub.f32 1.0, %v303
        %v305 = vmul.f32 %v302, %v304
        %v306 = vadd.f32 %v302, %v305
        %vm307 = vweird.f32 %v298
        %vm308 = vweird.f32 %v302
        %vm309 = vmor %vm307, %vm308
        %v310 = vsel %vm309, %v302, %v306
        %v311 = vand.u32 2147483647, %v298
        %vm312 = vcmp.eq.f32.partialorder %v311, 8.507059e+37
        %v313 = vand.u32 %v298, 2147483648
        %v314 = vor.u32 1.1754944e-38, %v313
        %v315 = vsel %vm312, %v314, %v310
        %v316 = vmul.f32 %v293, %v315
        %v317 = vrcp.pop %v301
        %v318 = vmul.f32 %v301, %v317
        %v319 = vsub.f32 1.0, %v318
        %v320 = vmul.f32 %v317, %v319
        %v321 = vadd.f32 %v317, %v320
        %vm322 = vweird.f32 %v301
        %vm323 = vweird.f32 %v317
        %vm324 = vmor %vm322, %vm323
        %v325 = vsel %vm324, %v317, %v321
        %v326 = vand.u32 2147483647, %v301
        %vm327 = vcmp.eq.f32.partialorder %v326, 8.507059e+37
        %v328 = vand.u32 %v301, 2147483648
        %v329 = vor.u32 1.1754944e-38, %v328
        %v330 = vsel %vm327, %v329, %v325
        %v331 = vmul.f32 %v295, %v330
        %332 = vrot.lane.b32.xlu0 %v238, 112
        %v333 = vpop.permute.xlu0 %332
        %334 = vrot.lane.b32.xlu0 %v241, 112
        %v335 = vpop.permute.xlu0 %334
        %v339 = vsel %vm283, %v316, 0
        %v342 = vsel %vm283, %v331, 0
        %344 = vmatpush.msra.mxu0 0.0
        %345 = vmatpush.msra.mxu0 0.0
        %346 = vmatpush.msra.mxu0 0.0
        %347 = vmatpush.msra.mxu0 0.0
        %348 = vmatpush.msra.mxu0 0.0
        %349 = vmatpush.msra.mxu0 0.0
        %350 = vmatpush.msra.mxu0 0.0
        %351 = vmatpush.msra.mxu0 0.0
        %352 = vmatpush.msra.mxu0 0.0
        %353 = vmatpush.msra.mxu0 0.0
        %354 = vmatpush.msra.mxu0 0.0
        %355 = vmatpush.msra.mxu0 0.0
        %356 = vmatpush.msra.mxu0 0.0
        %357 = vmatpush.msra.mxu0 0.0
        %358 = vmatpush.msra.mxu0 %v335
        %359 = vmatpush.msra.mxu0 %v333
        %360 = vmatmul.f32.gmra.mxu0 %v339
        %v361 = vpop.f32.mrf.mxu0
        %v362 = vadd.f32 0.0, %v361
        %363 = vmatmul.f32.gmra.mxu0 %v342
        %v364 = vpop.f32.mrf.mxu0
        %v365 = vadd.f32 0.0, %v364
        %366 = vdwg.mxu0
        %367 = vrot.lane.b32.xlu0 %v238, 124
        %v368 = vpop.permute.xlu0 %367
        %369 = vrot.lane.b32.xlu0 %v241, 124
        %v370 = vpop.permute.xlu0 %369
        %371 = vrot.lane.b32.xlu0 %v238, 116
        %v372 = vpop.permute.xlu0 %371
        %373 = vrot.lane.b32.xlu0 %v241, 116
        %v374 = vpop.permute.xlu0 %373
        %v375 = vsel %vm249, %v368, 0
        %v377 = vsel %vm249, %v370, 0
        %v379 = vsel %vm249, %v372, 0
        %v381 = vsel %vm249, %v374, 0
        %383 = vmatpush.xpose.msra.mxu0 0.0
        %384 = vmatpush.xpose.msra.mxu0 0.0
        %385 = vmatpush.xpose.msra.mxu0 0.0
        %386 = vmatpush.xpose.msra.mxu0 0.0
        %387 = vmatpush.xpose.msra.mxu0 0.0
        %388 = vmatpush.xpose.msra.mxu0 0.0
        %389 = vmatpush.xpose.msra.mxu0 0.0
        %390 = vmatpush.xpose.msra.mxu0 0.0
        %391 = vmatpush.xpose.msra.mxu0 0.0
        %392 = vmatpush.xpose.msra.mxu0 0.0
        %393 = vmatpush.xpose.msra.mxu0 0.0
        %394 = vmatpush.xpose.msra.mxu0 0.0
        %395 = vmatpush.xpose.msra.mxu0 0.0
        %396 = vmatpush.xpose.msra.mxu0 0.0
        %397 = vmatpush.xpose.msra.mxu0 %v381
        %398 = vmatpush.xpose.msra.mxu0 %v379
        %399 = vmatmul.f32.gmra.mxu0 %v375
        %v400 = vpop.f32.mrf.mxu0
        %v401 = vadd.f32 0.0, %v400
        %402 = vmatmul.f32.gmra.mxu0 %v377
        %v403 = vpop.f32.mrf.mxu0
        %v404 = vadd.f32 0.0, %v403
        %405 = vdwg.mxu0
        %v406 = vsel %vm206, %v401, -10000.0
        %v407 = vsel %vm207, %v404, -10000.0
        %v408 = vsel %vm283, %v406, -inf
        %409 = vmax.xlane.f32.xlu0 %v408
        %v410 = vpop.xlane.xlu0 %409
        %v411 = vsel %vm283, %v407, -inf
        %412 = vmax.xlane.f32.xlu0 %v411
        %v413 = vpop.xlane.xlu0 %412
        %v414 = vsub.f32 %v406, %v410
        %v415 = vsub.f32 %v407, %v413
        %v416 = vmul.f32 %v414, 1.442695
        %v417 = vpow.pop %v416
        %v418 = vmul.f32 %v415, 1.442695
        %v419 = vpow.pop %v418
        %v420 = vsel %vm283, %v417, 0.0
        %421 = vadd.xlane.f32.xlu0 %v420
        %v422 = vpop.xlane.xlu0 %421
        %v423 = vsel %vm283, %v419, 0.0
        %424 = vadd.xlane.f32.xlu0 %v423
        %v425 = vpop.xlane.xlu0 %424
        %v426 = vrcp.pop %v422
        %v427 = vmul.f32 %v422, %v426
        %v428 = vsub.f32 1.0, %v427
        %v429 = vmul.f32 %v426, %v428
        %v430 = vadd.f32 %v426, %v429
        %vm431 = vweird.f32 %v422
        %vm432 = vweird.f32 %v426
        %vm433 = vmor %vm431, %vm432
        %v434 = vsel %vm433, %v426, %v430
        %v435 = vand.u32 2147483647, %v422
        %vm436 = vcmp.eq.f32.partialorder %v435, 8.507059e+37
        %v437 = vand.u32 %v422, 2147483648
        %v438 = vor.u32 1.1754944e-38, %v437
        %v439 = vsel %vm436, %v438, %v434
        %v440 = vmul.f32 %v417, %v439
        %v441 = vrcp.pop %v425
        %v442 = vmul.f32 %v425, %v441
        %v443 = vsub.f32 1.0, %v442
        %v444 = vmul.f32 %v441, %v443
        %v445 = vadd.f32 %v441, %v444
        %vm446 = vweird.f32 %v425
        %vm447 = vweird.f32 %v441
        %vm448 = vmor %vm446, %vm447
        %v449 = vsel %vm448, %v441, %v445
        %v450 = vand.u32 2147483647, %v425
        %vm451 = vcmp.eq.f32.partialorder %v450, 8.507059e+37
        %v452 = vand.u32 %v425, 2147483648
        %v453 = vor.u32 1.1754944e-38, %v452
        %v454 = vsel %vm451, %v453, %v449
        %v455 = vmul.f32 %v419, %v454
        %456 = vrot.lane.b32.xlu0 %v238, 108
        %v457 = vpop.permute.xlu0 %456
        %458 = vrot.lane.b32.xlu0 %v241, 108
        %v459 = vpop.permute.xlu0 %458
        %v463 = vsel %vm283, %v440, 0
        %v466 = vsel %vm283, %v455, 0
        %468 = vmatpush.msra.mxu0 0.0
        %469 = vmatpush.msra.mxu0 0.0
        %470 = vmatpush.msra.mxu0 0.0
        %471 = vmatpush.msra.mxu0 0.0
        %472 = vmatpush.msra.mxu0 0.0
        %473 = vmatpush.msra.mxu0 0.0
        %474 = vmatpush.msra.mxu0 0.0
        %475 = vmatpush.msra.mxu0 0.0
        %476 = vmatpush.msra.mxu0 0.0
        %477 = vmatpush.msra.mxu0 0.0
        %478 = vmatpush.msra.mxu0 0.0
        %479 = vmatpush.msra.mxu0 0.0
        %480 = vmatpush.msra.mxu0 0.0
        %481 = vmatpush.msra.mxu0 0.0
        %482 = vmatpush.msra.mxu0 %v459
        %483 = vmatpush.msra.mxu0 %v457
        %484 = vmatmul.f32.gmra.mxu0 %v463
        %v485 = vpop.f32.mrf.mxu0
        %v486 = vadd.f32 0.0, %v485
        %487 = vmatmul.f32.gmra.mxu0 %v466
        %v488 = vpop.f32.mrf.mxu0
        %v489 = vadd.f32 0.0, %v488
        %490 = vdwg.mxu0
        %493 = vrot.lane.b32.xlu0 %v486, 4
        %v494 = vpop.permute.xlu0 %493
        %495 = vrot.lane.b32.xlu0 %v489, 4
        %v496 = vpop.permute.xlu0 %495
        %v499 = vsel %vm249, %v362, %v494
        %v500 = vsel %vm249, %v365, %v496
        %v501 = vld [vmem:[#allocation7 + $0x10] sm:$0xff]
        %v502 = vld [vmem:[#allocation7 + $0x18] sm:$0x1]
        %v503 = vperm.slane %v502, 0
        %v505 = vsel %vm213, %v499, 0
        %v508 = vsel %vm213, %v500, 0
        %510 = vmatpush.msra.mxu0 0.0
        %511 = vmatpush.msra.mxu0 0.0
        %512 = vmatpush.msra.mxu0 0.0
        %513 = vmatpush.msra.mxu0 0.0
        %514 = vmatpush.msra.mxu0 0.0
        %515 = vmatpush.msra.mxu0 0.0
        %516 = vmatpush.msra.mxu0 0.0
        %517 = vmatpush.msra.mxu0 0.0
        %518 = vmatpush.msra.mxu0 0.0
        %519 = vmatpush.msra.mxu0 0.0
        %520 = vmatpush.msra.mxu0 0.0
        %521 = vmatpush.msra.mxu0 0.0
        %522 = vmatpush.msra.mxu0 0.0
        %523 = vmatpush.msra.mxu0 0.0
        %524 = vmatpush.msra.mxu0 0.0
        %525 = vmatpush.msra.mxu0 %v501
        %526 = vmatmul.f32.gmra.mxu0 %v505
        %v527 = vpop.f32.mrf.mxu0
        %v528 = vadd.f32 %v503, %v527
        %529 = vmatmul.f32.gmra.mxu0 %v508
        %v530 = vpop.f32.mrf.mxu0
        %v531 = vadd.f32 %v503, %v530
        %532 = vdwg.mxu0
        %v533 = vadd.f32 %v208, %v528
        %v534 = vadd.f32 %v209, %v531
        %v535 = vld [vmem:[#allocation7 + $0x20] sm:$0x1]
        %v536 = vld [vmem:[#allocation7 + $0x28] sm:$0x1]
        %v537 = vsel %vm213, %v533, 0.0
        %538 = vadd.xlane.f32.xlu0 %v537
        %v539 = vpop.xlane.xlu0 %538
        %v540 = vsel %vm213, %v534, 0.0
        %541 = vadd.xlane.f32.xlu0 %v540
        %v542 = vpop.xlane.xlu0 %541
        %v543 = vrcp.pop 8.0
        %v544 = vmul.f32 8.0, %v543
        %v545 = vsub.f32 1.0, %v544
        %v546 = vmul.f32 %v543, %v545
        %v547 = vadd.f32 %v543, %v546
        %vm548 = vweird.f32 %v543
        %v549 = vsel %vm548, %v543, %v547
        %v550 = vmul.f32 %v539, %v549
        %v551 = vmul.f32 %v542, %v549
        %v552 = vsub.f32 %v533, %v550
        %v553 = vsub.f32 %v534, %v551
        %v554 = vmul.f32 %v552, %v552
        %v555 = vmul.f32 %v553, %v553
        %v556 = vsel %vm213, %v554, 0.0
        %557 = vadd.xlane.f32.xlu0 %v556
        %v558 = vpop.xlane.xlu0 %557
        %v559 = vsel %vm213, %v555, 0.0
        %560 = vadd.xlane.f32.xlu0 %v559
        %v561 = vpop.xlane.xlu0 %560
        %v562 = vmul.f32 %v558, %v549
        %v563 = vmul.f32 %v561, %v549
        %v564 = vadd.f32 %v562, 1e-05
        %v565 = vadd.f32 %v563, 1e-05
        %v566 = vrsqrt.pop %v564
        %v567 = vmul.f32 %v566, %v564
        %v568 = vmul.f32 %v567, %v566
        %v569 = vmul.f32 0.5, %v568
        %v570 = vsub.f32 1.5, %v569
        %v571 = vmul.f32 %v566, %v570
        %vm572 = vweird.f32 %v564
        %vm573 = vweird.f32 %v566
        %vm574 = vmor %vm572, %vm573
        %v575 = vsel %vm574, %v566, %v571
        %v576 = vrsqrt.pop %v565
        %v577 = vmul.f32 %v576, %v565
        %v578 = vmul.f32 %v577, %v576
        %v579 = vmul.f32 0.5, %v578
        %v580 = vsub.f32 1.5, %v579
        %v581 = vmul.f32 %v576, %v580
        %vm582 = vweird.f32 %v565
        %vm583 = vweird.f32 %v576
        %vm584 = vmor %vm582, %vm583
        %v585 = vsel %vm584, %v576, %v581
        %v586 = vmul.f32 %v552, %v575
        %v587 = vmul.f32 %v553, %v585
        %v588 = vperm.slane %v535, 0
        %v589 = vmul.f32 %v586, %v588
        %v590 = vmul.f32 %v587, %v588
        %v591 = vperm.slane %v536, 0
        %v592 = vadd.f32 %v589, %v591
        %v593 = vadd.f32 %v590, %v591
        %v594 = vmul.f32 %v592, %v201
        %v595 = vmul.f32 %v593, %v202
        %v596 = vld [vmem:[#allocation7 + $0x40] sm:$0xff]
        %v597 = vld [vmem:[#allocation7 + $0x48] sm:$0xff]
        %v598 = vld [vmem:[#allocation7 + $0x50] sm:$0xff]
        %v599 = vld [vmem:[#allocation7 + $0x58] sm:$0x1]
        %vm602 = vcmask 1040384
        %v603 = vrot.slane %v594, 7
        %v604 = vrot.slane %v595, 7
        %v605 = vsel %vm602, %v603, %v604
        %v609 = vsel %vm602, 0.0, %v603
        %v610 = vsel %vm602, %v604, 0.0
        %vm613 = vcmask 1046528
        %v614 = vrot.slane %v609, 1
        %v615 = vrot.slane %v605, 1
        %v616 = vsel %vm613, %v614, %v615
        %v617 = vrot.slane %v610, 1
        %v618 = vsel %vm613, %v615, %v617
        %619 = vrot.lane.b32.xlu0 %v616, 8
        %v620 = vpop.permute.xlu0 %619
        %621 = vrot.lane.b32.xlu0 %v618, 8
        %v622 = vpop.permute.xlu0 %621
        %vm625 = vcmask 1045504
        %v626 = vrot.slane %v609, 2
        %v627 = vrot.slane %v605, 2
        %v628 = vsel %vm625, %v626, %v627
        %v629 = vrot.slane %v610, 2
        %v630 = vsel %vm625, %v627, %v629
        %631 = vrot.lane.b32.xlu0 %v628, 16
        %v632 = vpop.permute.xlu0 %631
        %633 = vrot.lane.b32.xlu0 %v630, 16
        %v634 = vpop.permute.xlu0 %633
        %v637 = vsel %vm213, %v609, %v620
        %v638 = vsel %vm213, %v605, %v622
        %v639 = vsel %vm283, %v637, %v632
        %v640 = vsel %vm283, %v638, %v634
        %v641 = vperm.slane %v599, 0
        %vm642 = vcmask 195584
        %v644 = vsel %vm642, %v639, 0
        %v647 = vsel %vm642, %v640, 0
        %649 = vmatpush.msra.mxu0 0.0
        %650 = vmatpush.msra.mxu0 0.0
        %651 = vmatpush.msra.mxu0 0.0
        %652 = vmatpush.msra.mxu0 0.0
        %653 = vmatpush.msra.mxu0 0.0
        %654 = vmatpush.msra.mxu0 0.0
        %655 = vmatpush.msra.mxu0 0.0
        %656 = vmatpush.msra.mxu0 0.0
        %657 = vmatpush.msra.mxu0 0.0
        %658 = vmatpush.msra.mxu0 0.0
        %659 = vmatpush.msra.mxu0 0.0
        %660 = vmatpush.msra.mxu0 0.0
        %661 = vmatpush.msra.mxu0 0.0
        %662 = vmatpush.msra.mxu0 %v598
        %663 = vmatpush.msra.mxu0 %v597
        %664 = vmatpush.msra.mxu0 %v596
        %665 = vmatmul.f32.gmra.mxu0 %v644
        %v666 = vpop.f32.mrf.mxu0
        %v667 = vadd.f32 %v641, %v666
        %668 = vmatmul.f32.gmra.mxu0 %v647
        %v669 = vpop.f32.mrf.mxu0
        %v670 = vadd.f32 %v641, %v669
        %671 = vdwg.mxu0
        %v672 = vmax.f32 %v667, 0.0
        %v673 = vmax.f32 %v670, 0.0
        %v674 = vmul.f32 %v672, %v201
        %v675 = vmul.f32 %v673, %v202
        %v676 = vld [vmem:[#allocation7 + $0x60] sm:$0xff]
        %v677 = vld [vmem:[#allocation7 + $0x68] sm:$0xff]
        %v678 = vld [vmem:[#allocation7 + $0x70] sm:$0xff]
        %v679 = vld [vmem:[#allocation7 + $0x78] sm:$0x1]
        %v682 = vrot.slane %v674, 7
        %v683 = vrot.slane %v675, 7
        %v684 = vsel %vm602, %v682, %v683
        %v688 = vsel %vm602, 0.0, %v682
        %v689 = vsel %vm602, %v683, 0.0
        %v692 = vrot.slane %v688, 1
        %v693 = vrot.slane %v684, 1
        %v694 = vsel %vm613, %v692, %v693
        %v695 = vrot.slane %v689, 1
        %v696 = vsel %vm613, %v693, %v695
        %697 = vrot.lane.b32.xlu0 %v694, 8
        %v698 = vpop.permute.xlu0 %697
        %699 = vrot.lane.b32.xlu0 %v696, 8
        %v700 = vpop.permute.xlu0 %699
        %v703 = vrot.slane %v688, 2
        %v704 = vrot.slane %v684, 2
        %v705 = vsel %vm625, %v703, %v704
        %v706 = vrot.slane %v689, 2
        %v707 = vsel %vm625, %v704, %v706
        %708 = vrot.lane.b32.xlu0 %v705, 16
        %v709 = vpop.permute.xlu0 %708
        %710 = vrot.lane.b32.xlu0 %v707, 16
        %v711 = vpop.permute.xlu0 %710
        %v714 = vsel %vm213, %v688, %v698
        %v715 = vsel %vm213, %v684, %v700
        %v716 = vsel %vm283, %v714, %v709
        %v717 = vsel %vm283, %v715, %v711
        %v718 = vperm.slane %v679, 0
        %v720 = vsel %vm642, %v716, 0
        %v723 = vsel %vm642, %v717, 0
        %725 = vmatpush.msra.mxu0 0.0
        %726 = vmatpush.msra.mxu0 0.0
        %727 = vmatpush.msra.mxu0 0.0
        %728 = vmatpush.msra.mxu0 0.0
        %729 = vmatpush.msra.mxu0 0.0
        %730 = vmatpush.msra.mxu0 0.0
        %731 = vmatpush.msra.mxu0 0.0
        %732 = vmatpush.msra.mxu0 0.0
        %733 = vmatpush.msra.mxu0 0.0
        %734 = vmatpush.msra.mxu0 0.0
        %735 = vmatpush.msra.mxu0 0.0
        %736 = vmatpush.msra.mxu0 0.0
        %737 = vmatpush.msra.mxu0 0.0
        %738 = vmatpush.msra.mxu0 %v678
        %739 = vmatpush.msra.mxu0 %v677
        %740 = vmatpush.msra.mxu0 %v676
        %741 = vmatmul.f32.gmra.mxu0 %v720
        %v742 = vpop.f32.mrf.mxu0
        %v743 = vadd.f32 %v718, %v742
        %744 = vmatmul.f32.gmra.mxu0 %v723
        %v745 = vpop.f32.mrf.mxu0
        %v746 = vadd.f32 %v718, %v745
        %747 = vdwg.mxu0
        %v748 = vmul.f32 %v743, %v201
        %v749 = vmul.f32 %v746, %v202
        %v750 = vadd.f32 %v592, %v748
        %v751 = vadd.f32 %v593, %v749
        %v752 = vld [vmem:[#allocation7 + $0x30] sm:$0x1]
        %v753 = vld [vmem:[#allocation7 + $0x38] sm:$0x1]
        %v754 = vsel %vm213, %v750, 0.0
        %755 = vadd.xlane.f32.xlu0 %v754
        %v756 = vpop.xlane.xlu0 %755
        %v757 = vsel %vm213, %v751, 0.0
        %758 = vadd.xlane.f32.xlu0 %v757
        %v759 = vpop.xlane.xlu0 %758
        %v760 = vmul.f32 %v756, %v549
        %v761 = vmul.f32 %v759, %v549
        %v762 = vsub.f32 %v750, %v760
        %v763 = vsub.f32 %v751, %v761
        %v764 = vmul.f32 %v762, %v762
        %v765 = vmul.f32 %v763, %v763
        %v766 = vsel %vm213, %v764, 0.0
        %767 = vadd.xlane.f32.xlu0 %v766
        %v768 = vpop.xlane.xlu0 %767
        %v769 = vsel %vm213, %v765, 0.0
        %770 = vadd.xlane.f32.xlu0 %v769
        %v771 = vpop.xlane.xlu0 %770
        %v772 = vmul.f32 %v768, %v549
        %v773 = vmul.f32 %v771, %v549
        %v774 = vadd.f32 %v772, 1e-05
        %v775 = vadd.f32 %v773, 1e-05
        %v776 = vrsqrt.pop %v774
        %v777 = vmul.f32 %v776, %v774
        %v778 = vmul.f32 %v777, %v776
        %v779 = vmul.f32 0.5, %v778
        %v780 = vsub.f32 1.5, %v779
        %v781 = vmul.f32 %v776, %v780
        %vm782 = vweird.f32 %v774
        %vm783 = vweird.f32 %v776
        %vm784 = vmor %vm782, %vm783
        %v785 = vsel %vm784, %v776, %v781
        %v786 = vrsqrt.pop %v775
        %v787 = vmul.f32 %v786, %v775
        %v788 = vmul.f32 %v787, %v786
        %v789 = vmul.f32 0.5, %v788
        %v790 = vsub.f32 1.5, %v789
        %v791 = vmul.f32 %v786, %v790
        %vm792 = vweird.f32 %v775
        %vm793 = vweird.f32 %v786
        %vm794 = vmor %vm792, %vm793
        %v795 = vsel %vm794, %v786, %v791
        %v796 = vmul.f32 %v762, %v785
        %v797 = vmul.f32 %v763, %v795
        %v798 = vperm.slane %v752, 0
        %v799 = vmul.f32 %v796, %v798
        %v800 = vmul.f32 %v797, %v798
        %v801 = vperm.slane %v753, 0
        %v802 = vadd.f32 %v799, %v801
        %v803 = vadd.f32 %v800, %v801
        %v804 = vld [vmem:[#allocation7 + $0x80] sm:$0xff]
        %v805 = vld [vmem:[#allocation7 + $0x88] sm:$0x1]
        %v806 = vperm.slane %v805, 0
        %v808 = vsel %vm213, %v802, 0
        %v811 = vsel %vm213, %v803, 0
        %813 = vmatpush.msra.mxu0 0.0
        %814 = vmatpush.msra.mxu0 0.0
        %815 = vmatpush.msra.mxu0 0.0
        %816 = vmatpush.msra.mxu0 0.0
        %817 = vmatpush.msra.mxu0 0.0
        %818 = vmatpush.msra.mxu0 0.0
        %819 = vmatpush.msra.mxu0 0.0
        %820 = vmatpush.msra.mxu0 0.0
        %821 = vmatpush.msra.mxu0 0.0
        %822 = vmatpush.msra.mxu0 0.0
        %823 = vmatpush.msra.mxu0 0.0
        %824 = vmatpush.msra.mxu0 0.0
        %825 = vmatpush.msra.mxu0 0.0
        %826 = vmatpush.msra.mxu0 0.0
        %827 = vmatpush.msra.mxu0 0.0
        %828 = vmatpush.msra.mxu0 %v804
        %829 = vmatmul.f32.gmra.mxu0 %v808
        %v830 = vpop.f32.mrf.mxu0
        %v831 = vadd.f32 %v806, %v830
        %832 = vmatmul.f32.gmra.mxu0 %v811
        %v833 = vpop.f32.mrf.mxu0
        %v834 = vadd.f32 %v806, %v833
        %835 = vdwg.mxu0
        %838 = vrot.lane.b32.xlu0 %v831, 120
        %v839 = vpop.permute.xlu0 %838
        %840 = vrot.lane.b32.xlu0 %v834, 120
        %v841 = vpop.permute.xlu0 %840
        %v842 = vsel %vm249, %v831, 0
        %v844 = vsel %vm249, %v834, 0
        %v846 = vsel %vm249, %v839, 0
        %v848 = vsel %vm249, %v841, 0
        %850 = vmatpush.xpose.msra.mxu0 0.0
        %851 = vmatpush.xpose.msra.mxu0 0.0
        %852 = vmatpush.xpose.msra.mxu0 0.0
        %853 = vmatpush.xpose.msra.mxu0 0.0
        %854 = vmatpush.xpose.msra.mxu0 0.0
        %855 = vmatpush.xpose.msra.mxu0 0.0
        %856 = vmatpush.xpose.msra.mxu0 0.0
        %857 = vmatpush.xpose.msra.mxu0 0.0
        %858 = vmatpush.xpose.msra.mxu0 0.0
        %859 = vmatpush.xpose.msra.mxu0 0.0
        %860 = vmatpush.xpose.msra.mxu0 0.0
        %861 = vmatpush.xpose.msra.mxu0 0.0
        %862 = vmatpush.xpose.msra.mxu0 0.0
        %863 = vmatpush.xpose.msra.mxu0 0.0
        %864 = vmatpush.xpose.msra.mxu0 %v848
        %865 = vmatpush.xpose.msra.mxu0 %v846
        %866 = vmatmul.f32.gmra.mxu0 %v842
        %v867 = vpop.f32.mrf.mxu0
        %v868 = vadd.f32 0.0, %v867
        %869 = vmatmul.f32.gmra.mxu0 %v844
        %v870 = vpop.f32.mrf.mxu0
        %v871 = vadd.f32 0.0, %v870
        %872 = vdwg.mxu0
        %v873 = vsel %vm206, %v868, -10000.0
        %v874 = vsel %vm207, %v871, -10000.0
        %v875 = vsel %vm283, %v873, -inf
        %876 = vmax.xlane.f32.xlu0 %v875
        %v877 = vpop.xlane.xlu0 %876
        %v878 = vsel %vm283, %v874, -inf
        %879 = vmax.xlane.f32.xlu0 %v878
        %v880 = vpop.xlane.xlu0 %879
        %v881 = vsub.f32 %v873, %v877
        %v882 = vsub.f32 %v874, %v880
        %v883 = vmul.f32 %v881, 1.442695
        %v884 = vpow.pop %v883
        %v885 = vmul.f32 %v882, 1.442695
        %v886 = vpow.pop %v885
        %v887 = vsel %vm283, %v884, 0.0
        %888 = vadd.xlane.f32.xlu0 %v887
        %v889 = vpop.xlane.xlu0 %888
        %v890 = vsel %vm283, %v886, 0.0
        %891 = vadd.xlane.f32.xlu0 %v890
        %v892 = vpop.xlane.xlu0 %891
        %v893 = vrcp.pop %v889
        %v894 = vmul.f32 %v889, %v893
        %v895 = vsub.f32 1.0, %v894
        %v896 = vmul.f32 %v893, %v895
        %v897 = vadd.f32 %v893, %v896
        %vm898 = vweird.f32 %v889
        %vm899 = vweird.f32 %v893
        %vm900 = vmor %vm898, %vm899
        %v901 = vsel %vm900, %v893, %v897
        %v902 = vand.u32 2147483647, %v889
        %vm903 = vcmp.eq.f32.partialorder %v902, 8.507059e+37
        %v904 = vand.u32 %v889, 2147483648
        %v905 = vor.u32 1.1754944e-38, %v904
        %v906 = vsel %vm903, %v905, %v901
        %v907 = vmul.f32 %v884, %v906
        %v908 = vrcp.pop %v892
        %v909 = vmul.f32 %v892, %v908
        %v910 = vsub.f32 1.0, %v909
        %v911 = vmul.f32 %v908, %v910
        %v912 = vadd.f32 %v908, %v911
        %vm913 = vweird.f32 %v892
        %vm914 = vweird.f32 %v908
        %vm915 = vmor %vm913, %vm914
        %v916 = vsel %vm915, %v908, %v912
        %v917 = vand.u32 2147483647, %v892
        %vm918 = vcmp.eq.f32.partialorder %v917, 8.507059e+37
        %v919 = vand.u32 %v892, 2147483648
        %v920 = vor.u32 1.1754944e-38, %v919
        %v921 = vsel %vm918, %v920, %v916
        %v922 = vmul.f32 %v886, %v921
        %923 = vrot.lane.b32.xlu0 %v831, 112
        %v924 = vpop.permute.xlu0 %923
        %925 = vrot.lane.b32.xlu0 %v834, 112
        %v926 = vpop.permute.xlu0 %925
        %v930 = vsel %vm283, %v907, 0
        %v933 = vsel %vm283, %v922, 0
        %935 = vmatpush.msra.mxu0 0.0
        %936 = vmatpush.msra.mxu0 0.0
        %937 = vmatpush.msra.mxu0 0.0
        %938 = vmatpush.msra.mxu0 0.0
        %939 = vmatpush.msra.mxu0 0.0
        %940 = vmatpush.msra.mxu0 0.0
        %941 = vmatpush.msra.mxu0 0.0
        %942 = vmatpush.msra.mxu0 0.0
        %943 = vmatpush.msra.mxu0 0.0
        %944 = vmatpush.msra.mxu0 0.0
        %945 = vmatpush.msra.mxu0 0.0
        %946 = vmatpush.msra.mxu0 0.0
        %947 = vmatpush.msra.mxu0 0.0
        %948 = vmatpush.msra.mxu0 0.0
        %949 = vmatpush.msra.mxu0 %v926
        %950 = vmatpush.msra.mxu0 %v924
        %951 = vmatmul.f32.gmra.mxu0 %v930
        %v952 = vpop.f32.mrf.mxu0
        %v953 = vadd.f32 0.0, %v952
        %954 = vmatmul.f32.gmra.mxu0 %v933
        %v955 = vpop.f32.mrf.mxu0
        %v956 = vadd.f32 0.0, %v955
        %957 = vdwg.mxu0
        %958 = vrot.lane.b32.xlu0 %v831, 124
        %v959 = vpop.permute.xlu0 %958
        %960 = vrot.lane.b32.xlu0 %v834, 124
        %v961 = vpop.permute.xlu0 %960
        %962 = vrot.lane.b32.xlu0 %v831, 116
        %v963 = vpop.permute.xlu0 %962
        %964 = vrot.lane.b32.xlu0 %v834, 116
        %v965 = vpop.permute.xlu0 %964
        %v966 = vsel %vm249, %v959, 0
        %v968 = vsel %vm249, %v961, 0
        %v970 = vsel %vm249, %v963, 0
        %v972 = vsel %vm249, %v965, 0
        %974 = vmatpush.xpose.msra.mxu0 0.0
        %975 = vmatpush.xpose.msra.mxu0 0.0
        %976 = vmatpush.xpose.msra.mxu0 0.0
        %977 = vmatpush.xpose.msra.mxu0 0.0
        %978 = vmatpush.xpose.msra.mxu0 0.0
        %979 = vmatpush.xpose.msra.mxu0 0.0
        %980 = vmatpush.xpose.msra.mxu0 0.0
        %981 = vmatpush.xpose.msra.mxu0 0.0
        %982 = vmatpush.xpose.msra.mxu0 0.0
        %983 = vmatpush.xpose.msra.mxu0 0.0
        %984 = vmatpush.xpose.msra.mxu0 0.0
        %985 = vmatpush.xpose.msra.mxu0 0.0
        %986 = vmatpush.xpose.msra.mxu0 0.0
        %987 = vmatpush.xpose.msra.mxu0 0.0
        %988 = vmatpush.xpose.msra.mxu0 %v972
        %989 = vmatpush.xpose.msra.mxu0 %v970
        %990 = vmatmul.f32.gmra.mxu0 %v966
        %v991 = vpop.f32.mrf.mxu0
        %v992 = vadd.f32 0.0, %v991
        %993 = vmatmul.f32.gmra.mxu0 %v968
        %v994 = vpop.f32.mrf.mxu0
        %v995 = vadd.f32 0.0, %v994
        %996 = vdwg.mxu0
        %v997 = vsel %vm206, %v992, -10000.0
        %v998 = vsel %vm207, %v995, -10000.0
        %v999 = vsel %vm283, %v997, -inf
        %1000 = vmax.xlane.f32.xlu0 %v999
        %v1001 = vpop.xlane.xlu0 %1000
        %v1002 = vsel %vm283, %v998, -inf
        %1003 = vmax.xlane.f32.xlu0 %v1002
        %v1004 = vpop.xlane.xlu0 %1003
        %v1005 = vsub.f32 %v997, %v1001
        %v1006 = vsub.f32 %v998, %v1004
        %v1007 = vmul.f32 %v1005, 1.442695
        %v1008 = vpow.pop %v1007
        %v1009 = vmul.f32 %v1006, 1.442695
        %v1010 = vpow.pop %v1009
        %v1011 = vsel %vm283, %v1008, 0.0
        %1012 = vadd.xlane.f32.xlu0 %v1011
        %v1013 = vpop.xlane.xlu0 %1012
        %v1014 = vsel %vm283, %v1010, 0.0
        %1015 = vadd.xlane.f32.xlu0 %v1014
        %v1016 = vpop.xlane.xlu0 %1015
        %v1017 = vrcp.pop %v1013
        %v1018 = vmul.f32 %v1013, %v1017
        %v1019 = vsub.f32 1.0, %v1018
        %v1020 = vmul.f32 %v1017, %v1019
        %v1021 = vadd.f32 %v1017, %v1020
        %vm1022 = vweird.f32 %v1013
        %vm1023 = vweird.f32 %v1017
        %vm1024 = vmor %vm1022, %vm1023
        %v1025 = vsel %vm1024, %v1017, %v1021
        %v1026 = vand.u32 2147483647, %v1013
        %vm1027 = vcmp.eq.f32.partialorder %v1026, 8.507059e+37
        %v1028 = vand.u32 %v1013, 2147483648
        %v1029 = vor.u32 1.1754944e-38, %v1028
        %v1030 = vsel %vm1027, %v1029, %v1025
        %v1031 = vmul.f32 %v1008, %v1030
        %v1032 = vrcp.pop %v1016
        %v1033 = vmul.f32 %v1016, %v1032
        %v1034 = vsub.f32 1.0, %v1033
        %v1035 = vmul.f32 %v1032, %v1034
        %v1036 = vadd.f32 %v1032, %v1035
        %vm1037 = vweird.f32 %v1016
        %vm1038 = vweird.f32 %v1032
        %vm1039 = vmor %vm1037, %vm1038
        %v1040 = vsel %vm1039, %v1032, %v1036
        %v1041 = vand.u32 2147483647, %v1016
        %vm1042 = vcmp.eq.f32.partialorder %v1041, 8.507059e+37
        %v1043 = vand.u32 %v1016, 2147483648
        %v1044 = vor.u32 1.1754944e-38, %v1043
        %v1045 = vsel %vm1042, %v1044, %v1040
        %v1046 = vmul.f32 %v1010, %v1045
        %1047 = vrot.lane.b32.xlu0 %v831, 108
        %v1048 = vpop.permute.xlu0 %1047
        %1049 = vrot.lane.b32.xlu0 %v834, 108
        %v1050 = vpop.permute.xlu0 %1049
        %v1054 = vsel %vm283, %v1031, 0
        %v1057 = vsel %vm283, %v1046, 0
        %1059 = vmatpush.msra.mxu0 0.0
        %1060 = vmatpush.msra.mxu0 0.0
        %1061 = vmatpush.msra.mxu0 0.0
        %1062 = vmatpush.msra.mxu0 0.0
        %1063 = vmatpush.msra.mxu0 0.0
        %1064 = vmatpush.msra.mxu0 0.0
        %1065 = vmatpush.msra.mxu0 0.0
        %1066 = vmatpush.msra.mxu0 0.0
        %1067 = vmatpush.msra.mxu0 0.0
        %1068 = vmatpush.msra.mxu0 0.0
        %1069 = vmatpush.msra.mxu0 0.0
        %1070 = vmatpush.msra.mxu0 0.0
        %1071 = vmatpush.msra.mxu0 0.0
        %1072 = vmatpush.msra.mxu0 0.0
        %1073 = vmatpush.msra.mxu0 %v1050
        %1074 = vmatpush.msra.mxu0 %v1048
        %1075 = vmatmul.f32.gmra.mxu0 %v1054
        %v1076 = vpop.f32.mrf.mxu0
        %v1077 = vadd.f32 0.0, %v1076
        %1078 = vmatmul.f32.gmra.mxu0 %v1057
        %v1079 = vpop.f32.mrf.mxu0
        %v1080 = vadd.f32 0.0, %v1079
        %1081 = vdwg.mxu0
        %1084 = vrot.lane.b32.xlu0 %v1077, 4
        %v1085 = vpop.permute.xlu0 %1084
        %1086 = vrot.lane.b32.xlu0 %v1080, 4
        %v1087 = vpop.permute.xlu0 %1086
        %v1090 = vsel %vm249, %v953, %v1085
        %v1091 = vsel %vm249, %v956, %v1087
        %v1092 = vld [vmem:[#allocation7 + $0x90] sm:$0xff]
        %v1093 = vld [vmem:[#allocation7 + $0x98] sm:$0x1]
        %v1094 = vperm.slane %v1093, 0
        %v1096 = vsel %vm213, %v1090, 0
        %v1099 = vsel %vm213, %v1091, 0
        %1101 = vmatpush.msra.mxu0 0.0
        %1102 = vmatpush.msra.mxu0 0.0
        %1103 = vmatpush.msra.mxu0 0.0
        %1104 = vmatpush.msra.mxu0 0.0
        %1105 = vmatpush.msra.mxu0 0.0
        %1106 = vmatpush.msra.mxu0 0.0
        %1107 = vmatpush.msra.mxu0 0.0
        %1108 = vmatpush.msra.mxu0 0.0
        %1109 = vmatpush.msra.mxu0 0.0
        %1110 = vmatpush.msra.mxu0 0.0
        %1111 = vmatpush.msra.mxu0 0.0
        %1112 = vmatpush.msra.mxu0 0.0
        %1113 = vmatpush.msra.mxu0 0.0
        %1114 = vmatpush.msra.mxu0 0.0
        %1115 = vmatpush.msra.mxu0 0.0
        %1116 = vmatpush.msra.mxu0 %v1092
        %1117 = vmatmul.f32.gmra.mxu0 %v1096
        %v1118 = vpop.f32.mrf.mxu0
        %v1119 = vadd.f32 %v1094, %v1118
        %1120 = vmatmul.f32.gmra.mxu0 %v1099
        %v1121 = vpop.f32.mrf.mxu0
        %v1122 = vadd.f32 %v1094, %v1121
        %1123 = vdwg.mxu0
        %v1124 = vadd.f32 %v802, %v1119
        %v1125 = vadd.f32 %v803, %v1122
        %v1126 = vld [vmem:[#allocation7 + $0xa0] sm:$0x1]
        %v1127 = vld [vmem:[#allocation7 + $0xa8] sm:$0x1]
        %v1128 = vsel %vm213, %v1124, 0.0
        %1129 = vadd.xlane.f32.xlu0 %v1128
        %v1130 = vpop.xlane.xlu0 %1129
        %v1131 = vsel %vm213, %v1125, 0.0
        %1132 = vadd.xlane.f32.xlu0 %v1131
        %v1133 = vpop.xlane.xlu0 %1132
        %v1134 = vmul.f32 %v1130, %v549
        %v1135 = vmul.f32 %v1133, %v549
        %v1136 = vsub.f32 %v1124, %v1134
        %v1137 = vsub.f32 %v1125, %v1135
        %v1138 = vmul.f32 %v1136, %v1136
        %v1139 = vmul.f32 %v1137, %v1137
        %v1140 = vsel %vm213, %v1138, 0.0
        %1141 = vadd.xlane.f32.xlu0 %v1140
        %v1142 = vpop.xlane.xlu0 %1141
        %v1143 = vsel %vm213, %v1139, 0.0
        %1144 = vadd.xlane.f32.xlu0 %v1143
        %v1145 = vpop.xlane.xlu0 %1144
        %v1146 = vmul.f32 %v1142, %v549
        %v1147 = vmul.f32 %v1145, %v549
        %v1148 = vadd.f32 %v1146, 1e-05
        %v1149 = vadd.f32 %v1147, 1e-05
        %v1150 = vrsqrt.pop %v1148
        %v1151 = vmul.f32 %v1150, %v1148
        %v1152 = vmul.f32 %v1151, %v1150
        %v1153 = vmul.f32 0.5, %v1152
        %v1154 = vsub.f32 1.5, %v1153
        %v1155 = vmul.f32 %v1150, %v1154
        %vm1156 = vweird.f32 %v1148
        %vm1157 = vweird.f32 %v1150
        %vm1158 = vmor %vm1156, %vm1157
        %v1159 = vsel %vm1158, %v1150, %v1155
        %v1160 = vrsqrt.pop %v1149
        %v1161 = vmul.f32 %v1160, %v1149
        %v1162 = vmul.f32 %v1161, %v1160
        %v1163 = vmul.f32 0.5, %v1162
        %v1164 = vsub.f32 1.5, %v1163
        %v1165 = vmul.f32 %v1160, %v1164
        %vm1166 = vweird.f32 %v1149
        %vm1167 = vweird.f32 %v1160
        %vm1168 = vmor %vm1166, %vm1167
        %v1169 = vsel %vm1168, %v1160, %v1165
        %v1170 = vmul.f32 %v1136, %v1159
        %v1171 = vmul.f32 %v1137, %v1169
        %v1172 = vperm.slane %v1126, 0
        %v1173 = vmul.f32 %v1170, %v1172
        %v1174 = vmul.f32 %v1171, %v1172
        %v1175 = vperm.slane %v1127, 0
        %v1176 = vadd.f32 %v1173, %v1175
        %v1177 = vadd.f32 %v1174, %v1175
        %v1178 = vmul.f32 %v1176, %v201
        %v1179 = vmul.f32 %v1177, %v202
        %v1180 = vld [vmem:[#allocation7 + $0xc0] sm:$0xff]
        %v1181 = vld [vmem:[#allocation7 + $0xc8] sm:$0xff]
        %v1182 = vld [vmem:[#allocation7 + $0xd0] sm:$0xff]
        %v1183 = vld [vmem:[#allocation7 + $0xd8] sm:$0x1]
        %v1186 = vrot.slane %v1178, 7
        %v1187 = vrot.slane %v1179, 7
        %v1188 = vsel %vm602, %v1186, %v1187
        %v1192 = vsel %vm602, 0.0, %v1186
        %v1193 = vsel %vm602, %v1187, 0.0
        %v1196 = vrot.slane %v1192, 1
        %v1197 = vrot.slane %v1188, 1
        %v1198 = vsel %vm613, %v1196, %v1197
        %v1199 = vrot.slane %v1193, 1
        %v1200 = vsel %vm613, %v1197, %v1199
        %1201 = vrot.lane.b32.xlu0 %v1198, 8
        %v1202 = vpop.permute.xlu0 %1201
        %1203 = vrot.lane.b32.xlu0 %v1200, 8
        %v1204 = vpop.permute.xlu0 %1203
        %v1207 = vrot.slane %v1192, 2
        %v1208 = vrot.slane %v1188, 2
        %v1209 = vsel %vm625, %v1207, %v1208
        %v1210 = vrot.slane %v1193, 2
        %v1211 = vsel %vm625, %v1208, %v1210
        %1212 = vrot.lane.b32.xlu0 %v1209, 16
        %v1213 = vpop.permute.xlu0 %1212
        %1214 = vrot.lane.b32.xlu0 %v1211, 16
        %v1215 = vpop.permute.xlu0 %1214
        %v1218 = vsel %vm213, %v1192, %v1202
        %v1219 = vsel %vm213, %v1188, %v1204
        %v1220 = vsel %vm283, %v1218, %v1213
        %v1221 = vsel %vm283, %v1219, %v1215
        %v1222 = vperm.slane %v1183, 0
        %v1224 = vsel %vm642, %v1220, 0
        %v1227 = vsel %vm642, %v1221, 0
        %1229 = vmatpush.msra.mxu0 0.0
        %1230 = vmatpush.msra.mxu0 0.0
        %1231 = vmatpush.msra.mxu0 0.0
        %1232 = vmatpush.msra.mxu0 0.0
        %1233 = vmatpush.msra.mxu0 0.0
        %1234 = vmatpush.msra.mxu0 0.0
        %1235 = vmatpush.msra.mxu0 0.0
        %1236 = vmatpush.msra.mxu0 0.0
        %1237 = vmatpush.msra.mxu0 0.0
        %1238 = vmatpush.msra.mxu0 0.0
        %1239 = vmatpush.msra.mxu0 0.0
        %1240 = vmatpush.msra.mxu0 0.0
        %1241 = vmatpush.msra.mxu0 0.0
        %1242 = vmatpush.msra.mxu0 %v1182
        %1243 = vmatpush.msra.mxu0 %v1181
        %1244 = vmatpush.msra.mxu0 %v1180
        %1245 = vmatmul.f32.gmra.mxu0 %v1224
        %v1246 = vpop.f32.mrf.mxu0
        %v1247 = vadd.f32 %v1222, %v1246
        %1248 = vmatmul.f32.gmra.mxu0 %v1227
        %v1249 = vpop.f32.mrf.mxu0
        %v1250 = vadd.f32 %v1222, %v1249
        %1251 = vdwg.mxu0
        %v1252 = vmax.f32 %v1247, 0.0
        %v1253 = vmax.f32 %v1250, 0.0
        %v1254 = vmul.f32 %v1252, %v201
        %v1255 = vmul.f32 %v1253, %v202
        %v1256 = vld [vmem:[#allocation7 + $0xe0] sm:$0xff]
        %v1257 = vld [vmem:[#allocation7 + $0xe8] sm:$0xff]
        %v1258 = vld [vmem:[#allocation7 + $0xf0] sm:$0xff]
        %v1259 = vld [vmem:[#allocation7 + $0xf8] sm:$0x1]
        %v1262 = vrot.slane %v1254, 7
        %v1263 = vrot.slane %v1255, 7
        %v1264 = vsel %vm602, %v1262, %v1263
        %v1268 = vsel %vm602, 0.0, %v1262
        %v1269 = vsel %vm602, %v1263, 0.0
        %v1272 = vrot.slane %v1268, 1
        %v1273 = vrot.slane %v1264, 1
        %v1274 = vsel %vm613, %v1272, %v1273
        %v1275 = vrot.slane %v1269, 1
        %v1276 = vsel %vm613, %v1273, %v1275
        %1277 = vrot.lane.b32.xlu0 %v1274, 8
        %v1278 = vpop.permute.xlu0 %1277
        %1279 = vrot.lane.b32.xlu0 %v1276, 8
        %v1280 = vpop.permute.xlu0 %1279
        %v1283 = vrot.slane %v1268, 2
        %v1284 = vrot.slane %v1264, 2
        %v1285 = vsel %vm625, %v1283, %v1284
        %v1286 = vrot.slane %v1269, 2
        %v1287 = vsel %vm625, %v1284, %v1286
        %1288 = vrot.lane.b32.xlu0 %v1285, 16
        %v1289 = vpop.permute.xlu0 %1288
        %1290 = vrot.lane.b32.xlu0 %v1287, 16
        %v1291 = vpop.permute.xlu0 %1290
        %v1294 = vsel %vm213, %v1268, %v1278
        %v1295 = vsel %vm213, %v1264, %v1280
        %v1296 = vsel %vm283, %v1294, %v1289
        %v1297 = vsel %vm283, %v1295, %v1291
        %v1298 = vperm.slane %v1259, 0
        %v1300 = vsel %vm642, %v1296, 0
        %v1303 = vsel %vm642, %v1297, 0
        %1305 = vmatpush.msra.mxu0 0.0
        %1306 = vmatpush.msra.mxu0 0.0
        %1307 = vmatpush.msra.mxu0 0.0
        %1308 = vmatpush.msra.mxu0 0.0
        %1309 = vmatpush.msra.mxu0 0.0
        %1310 = vmatpush.msra.mxu0 0.0
        %1311 = vmatpush.msra.mxu0 0.0
        %1312 = vmatpush.msra.mxu0 0.0
        %1313 = vmatpush.msra.mxu0 0.0
        %1314 = vmatpush.msra.mxu0 0.0
        %1315 = vmatpush.msra.mxu0 0.0
        %1316 = vmatpush.msra.mxu0 0.0
        %1317 = vmatpush.msra.mxu0 0.0
        %1318 = vmatpush.msra.mxu0 %v1258
        %1319 = vmatpush.msra.mxu0 %v1257
        %1320 = vmatpush.msra.mxu0 %v1256
        %1321 = vmatmul.f32.gmra.mxu0 %v1300
        %v1322 = vpop.f32.mrf.mxu0
        %v1323 = vadd.f32 %v1298, %v1322
        %1324 = vmatmul.f32.gmra.mxu0 %v1303
        %v1325 = vpop.f32.mrf.mxu0
        %v1326 = vadd.f32 %v1298, %v1325
        %1327 = vdwg.mxu0
        %v1328 = vmul.f32 %v1323, %v201
        %v1329 = vmul.f32 %v1326, %v202
        %v1330 = vadd.f32 %v1176, %v1328
        %v1331 = vadd.f32 %v1177, %v1329
        %v1332 = vld [vmem:[#allocation7 + $0xb0] sm:$0x1]
        %v1333 = vld [vmem:[#allocation7 + $0xb8] sm:$0x1]
        %v1334 = vsel %vm213, %v1330, 0.0
        %1335 = vadd.xlane.f32.xlu0 %v1334
        %v1336 = vpop.xlane.xlu0 %1335
        %v1337 = vsel %vm213, %v1331, 0.0
        %1338 = vadd.xlane.f32.xlu0 %v1337
        %v1339 = vpop.xlane.xlu0 %1338
        %v1340 = vmul.f32 %v1336, %v549
        %v1341 = vmul.f32 %v1339, %v549
        %v1342 = vsub.f32 %v1330, %v1340
        %v1343 = vsub.f32 %v1331, %v1341
        %v1344 = vmul.f32 %v1342, %v1342
        %v1345 = vmul.f32 %v1343, %v1343
        %v1346 = vsel %vm213, %v1344, 0.0
        %1347 = vadd.xlane.f32.xlu0 %v1346
        %v1348 = vpop.xlane.xlu0 %1347
        %v1349 = vsel %vm213, %v1345, 0.0
        %1350 = vadd.xlane.f32.xlu0 %v1349
        %v1351 = vpop.xlane.xlu0 %1350
        %v1352 = vmul.f32 %v1348, %v549
        %v1353 = vmul.f32 %v1351, %v549
        %v1354 = vadd.f32 %v1352, 1e-05
        %v1355 = vadd.f32 %v1353, 1e-05
        %v1356 = vrsqrt.pop %v1354
        %v1357 = vmul.f32 %v1356, %v1354
        %v1358 = vmul.f32 %v1357, %v1356
        %v1359 = vmul.f32 0.5, %v1358
        %v1360 = vsub.f32 1.5, %v1359
        %v1361 = vmul.f32 %v1356, %v1360
        %vm1362 = vweird.f32 %v1354
        %vm1363 = vweird.f32 %v1356
        %vm1364 = vmor %vm1362, %vm1363
        %v1365 = vsel %vm1364, %v1356, %v1361
        %v1366 = vrsqrt.pop %v1355
        %v1367 = vmul.f32 %v1366, %v1355
        %v1368 = vmul.f32 %v1367, %v1366
        %v1369 = vmul.f32 0.5, %v1368
        %v1370 = vsub.f32 1.5, %v1369
        %v1371 = vmul.f32 %v1366, %v1370
        %vm1372 = vweird.f32 %v1355
        %vm1373 = vweird.f32 %v1366
        %vm1374 = vmor %vm1372, %vm1373
        %v1375 = vsel %vm1374, %v1366, %v1371
        %v1376 = vmul.f32 %v1342, %v1365
        %v1377 = vmul.f32 %v1343, %v1375
        %v1378 = vperm.slane %v1332, 0
        %v1379 = vmul.f32 %v1376, %v1378
        %v1380 = vmul.f32 %v1377, %v1378
        %v1381 = vperm.slane %v1333, 0
        %v1382 = vadd.f32 %v1379, %v1381
        %v1383 = vadd.f32 %v1380, %v1381
        %v1384 = vmul.f32 %v1382, %v201
        %v1385 = vmul.f32 %v1383, %v202
        %v1386 = vadd.f32 %v1384, %v191
        %v1387 = vadd.f32 %v1385, %v192
        %v1388 = vld [vmem:[#allocation7 + $0x100] sm:$0xff]
        %v1389 = vld [vmem:[#allocation7 + $0x108] sm:$0x1]
        %v1390 = vperm.slane %v1389, 0
        %v1392 = vsel %vm213, %v1386, 0
        %v1395 = vsel %vm213, %v1387, 0
        %1397 = vmatpush.msra.mxu0 0.0
        %1398 = vmatpush.msra.mxu0 0.0
        %1399 = vmatpush.msra.mxu0 0.0
        %1400 = vmatpush.msra.mxu0 0.0
        %1401 = vmatpush.msra.mxu0 0.0
        %1402 = vmatpush.msra.mxu0 0.0
        %1403 = vmatpush.msra.mxu0 0.0
        %1404 = vmatpush.msra.mxu0 0.0
        %1405 = vmatpush.msra.mxu0 0.0
        %1406 = vmatpush.msra.mxu0 0.0
        %1407 = vmatpush.msra.mxu0 0.0
        %1408 = vmatpush.msra.mxu0 0.0
        %1409 = vmatpush.msra.mxu0 0.0
        %1410 = vmatpush.msra.mxu0 0.0
        %1411 = vmatpush.msra.mxu0 0.0
        %1412 = vmatpush.msra.mxu0 %v1388
        %1413 = vmatmul.f32.gmra.mxu0 %v1392
        %v1414 = vpop.f32.mrf.mxu0
        %v1415 = vadd.f32 %v1390, %v1414
        %1416 = vmatmul.f32.gmra.mxu0 %v1395
        %v1417 = vpop.f32.mrf.mxu0
        %v1418 = vadd.f32 %v1390, %v1417
        %1419 = vdwg.mxu0
        %v1420 = vmul.f32 %v1415, %v201
        %v1421 = vmul.f32 %v1418, %v202
        %v1422 = vld [vmem:[#allocation7 + $0x110] sm:$0xff]
        %v1423 = vld [vmem:[#allocation7 + $0x118] sm:$0xff]
        %v1424 = vld [vmem:[#allocation7 + $0x120] sm:$0xff]
        %v1425 = vld [vmem:[#allocation7 + $0x128] sm:$0xff]
        %v1426 = vld [vmem:[#allocation7 + $0x130] sm:$0xff]
        %v1427 = vld [vmem:[#allocation7 + $0x138] sm:$0xff]
        %v1428 = vld [vmem:[#allocation7 + $0x140] sm:$0xff]
        %v1429 = vld [vmem:[#allocation7 + $0x148] sm:$0xff]
        %v1430 = vld [vmem:[#allocation7 + $0x150] sm:$0xff]
        %v1431 = vld [vmem:[#allocation7 + $0x158] sm:$0xff]
        %v1432 = vld [vmem:[#allocation7 + $0x160] sm:$0x1]
        %vm1435 = vcmask 1041408
        %v1436 = vrot.slane %v1420, 6
        %v1437 = vrot.slane %v1421, 6
        %v1438 = vsel %vm1435, %v1436, %v1437
        %v1442 = vsel %vm1435, 0.0, %v1436
        %v1443 = vsel %vm1435, %v1437, 0.0
        %v1446 = vrot.slane %v1442, 1
        %v1447 = vrot.slane %v1438, 1
        %v1448 = vsel %vm613, %v1446, %v1447
        %v1449 = vrot.slane %v1443, 1
        %v1450 = vsel %vm613, %v1447, %v1449
        %1451 = vrot.lane.b32.xlu0 %v1448, 16
        %v1452 = vpop.permute.xlu0 %1451
        %1453 = vrot.lane.b32.xlu0 %v1450, 16
        %v1454 = vpop.permute.xlu0 %1453
        %v1457 = vrot.slane %v1442, 2
        %v1458 = vrot.slane %v1438, 2
        %v1459 = vsel %vm625, %v1457, %v1458
        %v1460 = vrot.slane %v1443, 2
        %v1461 = vsel %vm625, %v1458, %v1460
        %1462 = vrot.lane.b32.xlu0 %v1459, 32
        %v1463 = vpop.permute.xlu0 %1462
        %1464 = vrot.lane.b32.xlu0 %v1461, 32
        %v1465 = vpop.permute.xlu0 %1464
        %vm1468 = vcmask 1044480
        %v1469 = vrot.slane %v1442, 3
        %v1470 = vrot.slane %v1438, 3
        %v1471 = vsel %vm1468, %v1469, %v1470
        %v1472 = vrot.slane %v1443, 3
        %v1473 = vsel %vm1468, %v1470, %v1472
        %1474 = vrot.lane.b32.xlu0 %v1471, 48
        %v1475 = vpop.permute.xlu0 %1474
        %1476 = vrot.lane.b32.xlu0 %v1473, 48
        %v1477 = vpop.permute.xlu0 %1476
        %vm1480 = vcmask 1043456
        %v1481 = vrot.slane %v1442, 4
        %v1482 = vrot.slane %v1438, 4
        %v1483 = vsel %vm1480, %v1481, %v1482
        %v1484 = vrot.slane %v1443, 4
        %v1485 = vsel %vm1480, %v1482, %v1484
        %1486 = vrot.lane.b32.xlu0 %v1483, 64
        %v1487 = vpop.permute.xlu0 %1486
        %1488 = vrot.lane.b32.xlu0 %v1485, 64
        %v1489 = vpop.permute.xlu0 %1488
        %v1492 = vsel %vm283, %v1442, %v1452
        %v1493 = vsel %vm283, %v1438, %v1454
        %vm1494 = vcmask 261120
        %v1495 = vsel %vm1494, %v1492, %v1463
        %v1496 = vsel %vm1494, %v1493, %v1465
        %vm1497 = vcmask 392192
        %v1498 = vsel %vm1497, %v1495, %v1475
        %v1499 = vsel %vm1497, %v1496, %v1477
        %vm1500 = vcmask 523264
        %v1501 = vsel %vm1500, %v1498, %v1487
        %v1502 = vsel %vm1500, %v1499, %v1489
        %v1503 = vperm.slane %v1432, 0
        %vm1504 = vcmask 654336
        %v1506 = vsel %vm1504, %v1501, 0
        %v1509 = vsel %vm1504, %v1502, 0
        %1511 = vmatpush.msra.mxu0 0.0
        %1512 = vmatpush.msra.mxu0 0.0
        %1513 = vmatpush.msra.mxu0 0.0
        %1514 = vmatpush.msra.mxu0 0.0
        %1515 = vmatpush.msra.mxu0 0.0
        %1516 = vmatpush.msra.mxu0 0.0
        %1517 = vmatpush.msra.mxu0 %v1431
        %1518 = vmatpush.msra.mxu0 %v1430
        %1519 = vmatpush.msra.mxu0 %v1429
        %1520 = vmatpush.msra.mxu0 %v1428
        %1521 = vmatpush.msra.mxu0 %v1427
        %1522 = vmatpush.msra.mxu0 %v1426
        %1523 = vmatpush.msra.mxu0 %v1425
        %1524 = vmatpush.msra.mxu0 %v1424
        %1525 = vmatpush.msra.mxu0 %v1423
        %1526 = vmatpush.msra.mxu0 %v1422
        %1527 = vmatmul.f32.gmra.mxu0 %v1506
        %v1528 = vpop.f32.mrf.mxu0
        %v1529 = vadd.f32 %v1503, %v1528
        %1530 = vmatmul.f32.gmra.mxu0 %v1509
        %v1531 = vpop.f32.mrf.mxu0
        %v1532 = vadd.f32 %v1503, %v1531
        %1533 = vdwg.mxu0
        %v1534 = vtanh.pop %v1529
        %v1535 = vtanh.pop %v1532
        %v1536 = vxor.u32 %v1529, 2147483648
        %v1537 = vxor.u32 %v1532, 2147483648
        %v1538 = vmul.f32 %v1536, 1.442695
        %v1539 = vpow.pop %v1538
        %v1540 = vmul.f32 %v1537, 1.442695
        %v1541 = vpow.pop %v1540
        %v1542 = vadd.f32 %v1539, 1.0
        %v1543 = vadd.f32 %v1541, 1.0
        %v1544 = vrcp.pop %v1542
        %v1545 = vmul.f32 %v1542, %v1544
        %v1546 = vsub.f32 1.0, %v1545
        %v1547 = vmul.f32 %v1544, %v1546
        %v1548 = vadd.f32 %v1544, %v1547
        %vm1549 = vweird.f32 %v1542
        %vm1550 = vweird.f32 %v1544
        %vm1551 = vmor %vm1549, %vm1550
        %v1552 = vsel %vm1551, %v1544, %v1548
        %v1553 = vand.u32 2147483647, %v1542
        %vm1554 = vcmp.eq.f32.partialorder %v1553, 8.507059e+37
        %v1555 = vand.u32 %v1542, 2147483648
        %v1556 = vor.u32 1.1754944e-38, %v1555
        %v1557 = vsel %vm1554, %v1556, %v1552
        %v1558 = vmul.f32 1.0, %v1557
        %v1559 = vrcp.pop %v1543
        %v1560 = vmul.f32 %v1543, %v1559
        %v1561 = vsub.f32 1.0, %v1560
        %v1562 = vmul.f32 %v1559, %v1561
        %v1563 = vadd.f32 %v1559, %v1562
        %vm1564 = vweird.f32 %v1543
        %vm1565 = vweird.f32 %v1559
        %vm1566 = vmor %vm1564, %vm1565
        %v1567 = vsel %vm1566, %v1559, %v1563
        %v1568 = vand.u32 2147483647, %v1543
        %vm1569 = vcmp.eq.f32.partialorder %v1568, 8.507059e+37
        %v1570 = vand.u32 %v1543, 2147483648
        %v1571 = vor.u32 1.1754944e-38, %v1570
        %v1572 = vsel %vm1569, %v1571, %v1567
        %v1573 = vmul.f32 1.0, %v1572
        %1576 = vrot.lane.b32.xlu0 %v1558, 112
        %v1577 = vpop.permute.xlu0 %1576
        %1578 = vrot.lane.b32.xlu0 %v1573, 112
        %v1579 = vpop.permute.xlu0 %1578
        %v1582 = vmul.f32 %v1534, %v1577
        %v1583 = vmul.f32 %v1535, %v1579
        %v1584 = vld [vmem:[#allocation7 + $0x168] sm:$0xff]
        %v1585 = vld [vmem:[#allocation7 + $0x170] sm:$0xff]
        %v1586 = vld [vmem:[#allocation7 + $0x178] sm:$0x1]
        %v1587 = vperm.slane %v1586, 0
        %v1589 = vsel %vm283, %v1582, 0
        %v1592 = vsel %vm283, %v1583, 0
        %1594 = vmatpush.msra.mxu0 0.0
        %1595 = vmatpush.msra.mxu0 0.0
        %1596 = vmatpush.msra.mxu0 0.0
        %1597 = vmatpush.msra.mxu0 0.0
        %1598 = vmatpush.msra.mxu0 0.0
        %1599 = vmatpush.msra.mxu0 0.0
        %1600 = vmatpush.msra.mxu0 0.0
        %1601 = vmatpush.msra.mxu0 0.0
        %1602 = vmatpush.msra.mxu0 0.0
        %1603 = vmatpush.msra.mxu0 0.0
        %1604 = vmatpush.msra.mxu0 0.0
        %1605 = vmatpush.msra.mxu0 0.0
        %1606 = vmatpush.msra.mxu0 0.0
        %1607 = vmatpush.msra.mxu0 0.0
        %1608 = vmatpush.msra.mxu0 %v1585
        %1609 = vmatpush.msra.mxu0 %v1584
        %1610 = vmatmul.f32.gmra.mxu0 %v1589
        %v1611 = vpop.f32.mrf.mxu0
        %v1612 = vadd.f32 %v1587, %v1611
        %1613 = vmatmul.f32.gmra.mxu0 %v1592
        %v1614 = vpop.f32.mrf.mxu0
        %v1615 = vadd.f32 %v1587, %v1614
        %1616 = vdwg.mxu0
        %v1617 = vadd.f32 %v1420, %v1612
        %v1618 = vadd.f32 %v1421, %v1615
        %v1619 = vmul.f32 %v1617, %v201
        %v1620 = vmul.f32 %v1618, %v202
        %v1621 = vadd.f32 %v1612, 0.0
        %v1622 = vadd.f32 %v1615, 0.0
        %v1623 = vld [vmem:[#allocation7 + $0x180] sm:$0xff]
        %v1624 = vld [vmem:[#allocation7 + $0x188] sm:$0xff]
        %v1625 = vld [vmem:[#allocation7 + $0x190] sm:$0xff]
        %v1626 = vld [vmem:[#allocation7 + $0x198] sm:$0xff]
        %v1627 = vld [vmem:[#allocation7 + $0x1a0] sm:$0xff]
        %v1628 = vld [vmem:[#allocation7 + $0x1a8] sm:$0xff]
        %v1629 = vld [vmem:[#allocation7 + $0x1b0] sm:$0xff]
        %v1630 = vld [vmem:[#allocation7 + $0x1b8] sm:$0xff]
        %v1631 = vld [vmem:[#allocation7 + $0x1c0] sm:$0xff]
        %v1632 = vld [vmem:[#allocation7 + $0x1c8] sm:$0xff]
        %v1633 = vld [vmem:[#allocation7 + $0x1d0] sm:$0x1]
        %v1636 = vrot.slane %v1619, 6
        %v1637 = vrot.slane %v1620, 6
        %v1638 = vsel %vm1435, %v1636, %v1637
        %v1642 = vsel %vm1435, 0.0, %v1636
        %v1643 = vsel %vm1435, %v1637, 0.0
        %v1646 = vrot.slane %v1642, 1
        %v1647 = vrot.slane %v1638, 1
        %v1648 = vsel %vm613, %v1646, %v1647
        %v1649 = vrot.slane %v1643, 1
        %v1650 = vsel %vm613, %v1647, %v1649
        %1651 = vrot.lane.b32.xlu0 %v1648, 16
        %v1652 = vpop.permute.xlu0 %1651
        %1653 = vrot.lane.b32.xlu0 %v1650, 16
        %v1654 = vpop.permute.xlu0 %1653
        %v1657 = vrot.slane %v1642, 2
        %v1658 = vrot.slane %v1638, 2
        %v1659 = vsel %vm625, %v1657, %v1658
        %v1660 = vrot.slane %v1643, 2
        %v1661 = vsel %vm625, %v1658, %v1660
        %1662 = vrot.lane.b32.xlu0 %v1659, 32
        %v1663 = vpop.permute.xlu0 %1662
        %1664 = vrot.lane.b32.xlu0 %v1661, 32
        %v1665 = vpop.permute.xlu0 %1664
        %v1668 = vrot.slane %v1642, 3
        %v1669 = vrot.slane %v1638, 3
        %v1670 = vsel %vm1468, %v1668, %v1669
        %v1671 = vrot.slane %v1643, 3
        %v1672 = vsel %vm1468, %v1669, %v1671
        %1673 = vrot.lane.b32.xlu0 %v1670, 48
        %v1674 = vpop.permute.xlu0 %1673
        %1675 = vrot.lane.b32.xlu0 %v1672, 48
        %v1676 = vpop.permute.xlu0 %1675
        %v1679 = vrot.slane %v1642, 4
        %v1680 = vrot.slane %v1638, 4
        %v1681 = vsel %vm1480, %v1679, %v1680
        %v1682 = vrot.slane %v1643, 4
        %v1683 = vsel %vm1480, %v1680, %v1682
        %1684 = vrot.lane.b32.xlu0 %v1681, 64
        %v1685 = vpop.permute.xlu0 %1684
        %1686 = vrot.lane.b32.xlu0 %v1683, 64
        %v1687 = vpop.permute.xlu0 %1686
        %v1690 = vsel %vm283, %v1642, %v1652
        %v1691 = vsel %vm283, %v1638, %v1654
        %v1692 = vsel %vm1494, %v1690, %v1663
        %v1693 = vsel %vm1494, %v1691, %v1665
        %v1694 = vsel %vm1497, %v1692, %v1674
        %v1695 = vsel %vm1497, %v1693, %v1676
        %v1696 = vsel %vm1500, %v1694, %v1685
        %v1697 = vsel %vm1500, %v1695, %v1687
        %v1698 = vperm.slane %v1633, 0
        %v1700 = vsel %vm1504, %v1696, 0
        %v1703 = vsel %vm1504, %v1697, 0
        %1705 = vmatpush.msra.mxu0 0.0
        %1706 = vmatpush.msra.mxu0 0.0
        %1707 = vmatpush.msra.mxu0 0.0
        %1708 = vmatpush.msra.mxu0 0.0
        %1709 = vmatpush.msra.mxu0 0.0
        %1710 = vmatpush.msra.mxu0 0.0
        %1711 = vmatpush.msra.mxu0 %v1632
        %1712 = vmatpush.msra.mxu0 %v1631
        %1713 = vmatpush.msra.mxu0 %v1630
        %1714 = vmatpush.msra.mxu0 %v1629
        %1715 = vmatpush.msra.mxu0 %v1628
        %1716 = vmatpush.msra.mxu0 %v1627
        %1717 = vmatpush.msra.mxu0 %v1626
        %1718 = vmatpush.msra.mxu0 %v1625
        %1719 = vmatpush.msra.mxu0 %v1624
        %1720 = vmatpush.msra.mxu0 %v1623
        %1721 = vmatmul.f32.gmra.mxu0 %v1700
        %v1722 = vpop.f32.mrf.mxu0
        %v1723 = vadd.f32 %v1698, %v1722
        %1724 = vmatmul.f32.gmra.mxu0 %v1703
        %v1725 = vpop.f32.mrf.mxu0
        %v1726 = vadd.f32 %v1698, %v1725
        %1727 = vdwg.mxu0
        %v1728 = vtanh.pop %v1723
        %v1729 = vtanh.pop %v1726
        %v1730 = vxor.u32 %v1723, 2147483648
        %v1731 = vxor.u32 %v1726, 2147483648
        %v1732 = vmul.f32 %v1730, 1.442695
        %v1733 = vpow.pop %v1732
        %v1734 = vmul.f32 %v1731, 1.442695
        %v1735 = vpow.pop %v1734
        %v1736 = vadd.f32 %v1733, 1.0
        %v1737 = vadd.f32 %v1735, 1.0
        %v1738 = vrcp.pop %v1736
        %v1739 = vmul.f32 %v1736, %v1738
        %v1740 = vsub.f32 1.0, %v1739
        %v1741 = vmul.f32 %v1738, %v1740
        %v1742 = vadd.f32 %v1738, %v1741
        %vm1743 = vweird.f32 %v1736
        %vm1744 = vweird.f32 %v1738
        %vm1745 = vmor %vm1743, %vm1744
        %v1746 = vsel %vm1745, %v1738, %v1742
        %v1747 = vand.u32 2147483647, %v1736
        %vm1748 = vcmp.eq.f32.partialorder %v1747, 8.507059e+37
        %v1749 = vand.u32 %v1736, 2147483648
        %v1750 = vor.u32 1.1754944e-38, %v1749
        %v1751 = vsel %vm1748, %v1750, %v1746
        %v1752 = vmul.f32 1.0, %v1751
        %v1753 = vrcp.pop %v1737
        %v1754 = vmul.f32 %v1737, %v1753
        %v1755 = vsub.f32 1.0, %v1754
        %v1756 = vmul.f32 %v1753, %v1755
        %v1757 = vadd.f32 %v1753, %v1756
        %vm1758 = vweird.f32 %v1737
        %vm1759 = vweird.f32 %v1753
        %vm1760 = vmor %vm1758, %vm1759
        %v1761 = vsel %vm1760, %v1753, %v1757
        %v1762 = vand.u32 2147483647, %v1737
        %vm1763 = vcmp.eq.f32.partialorder %v1762, 8.507059e+37
        %v1764 = vand.u32 %v1737, 2147483648
        %v1765 = vor.u32 1.1754944e-38, %v1764
        %v1766 = vsel %vm1763, %v1765, %v1761
        %v1767 = vmul.f32 1.0, %v1766
        %1770 = vrot.lane.b32.xlu0 %v1752, 112
        %v1771 = vpop.permute.xlu0 %1770
        %1772 = vrot.lane.b32.xlu0 %v1767, 112
        %v1773 = vpop.permute.xlu0 %1772
        %v1776 = vmul.f32 %v1728, %v1771
        %v1777 = vmul.f32 %v1729, %v1773
        %v1778 = vld [vmem:[#allocation7 + $0x1d8] sm:$0xff]
        %v1779 = vld [vmem:[#allocation7 + $0x1e0] sm:$0xff]
        %v1780 = vld [vmem:[#allocation7 + $0x1e8] sm:$0x1]
        %v1781 = vperm.slane %v1780, 0
        %v1783 = vsel %vm283, %v1776, 0
        %v1786 = vsel %vm283, %v1777, 0
        %1788 = vmatpush.msra.mxu0 0.0
        %1789 = vmatpush.msra.mxu0 0.0
        %1790 = vmatpush.msra.mxu0 0.0
        %1791 = vmatpush.msra.mxu0 0.0
        %1792 = vmatpush.msra.mxu0 0.0
        %1793 = vmatpush.msra.mxu0 0.0
        %1794 = vmatpush.msra.mxu0 0.0
        %1795 = vmatpush.msra.mxu0 0.0
        %1796 = vmatpush.msra.mxu0 0.0
        %1797 = vmatpush.msra.mxu0 0.0
        %1798 = vmatpush.msra.mxu0 0.0
        %1799 = vmatpush.msra.mxu0 0.0
        %1800 = vmatpush.msra.mxu0 0.0
        %1801 = vmatpush.msra.mxu0 0.0
        %1802 = vmatpush.msra.mxu0 %v1779
        %1803 = vmatpush.msra.mxu0 %v1778
        %1804 = vmatmul.f32.gmra.mxu0 %v1783
        %v1805 = vpop.f32.mrf.mxu0
        %v1806 = vadd.f32 %v1781, %v1805
        %1807 = vmatmul.f32.gmra.mxu0 %v1786
        %v1808 = vpop.f32.mrf.mxu0
        %v1809 = vadd.f32 %v1781, %v1808
        %1810 = vdwg.mxu0
        %1813 = vrot.lane.b32.xlu0 %v1806, 16
        %v1814 = vpop.permute.xlu0 %1813
        %1815 = vrot.lane.b32.xlu0 %v1809, 16
        %v1816 = vpop.permute.xlu0 %1815
        %v1819 = vadd.f32 %v1621, %v1814
        %v1820 = vadd.f32 %v1622, %v1816
        %v1821 = vmul.f32 %v1819, %v201
        %v1822 = vmul.f32 %v1820, %v202
        %v1823 = vld [vmem:[#allocation7 + $0x1f0] sm:$0xff]
        %v1824 = vld [vmem:[#allocation7 + $0x1f8] sm:$0xff]
        %v1825 = vld [vmem:[#allocation7 + $0x200] sm:$0x1]
        %v1826 = vperm.slane %v1825, 0
        %1829 = vrot.lane.b32.xlu0 %v1821, 112
        %v1830 = vpop.permute.xlu0 %1829
        %1831 = vrot.lane.b32.xlu0 %v1822, 112
        %v1832 = vpop.permute.xlu0 %1831
        %v1833 = vsel %vm283, %v1830, 0
        %v1835 = vsel %vm283, %v1832, 0
        %1837 = vmatpush.msra.mxu0 0.0
        %1838 = vmatpush.msra.mxu0 0.0
        %1839 = vmatpush.msra.mxu0 0.0
        %1840 = vmatpush.msra.mxu0 0.0
        %1841 = vmatpush.msra.mxu0 0.0
        %1842 = vmatpush.msra.mxu0 0.0
        %1843 = vmatpush.msra.mxu0 0.0
        %1844 = vmatpush.msra.mxu0 0.0
        %1845 = vmatpush.msra.mxu0 0.0
        %1846 = vmatpush.msra.mxu0 0.0
        %1847 = vmatpush.msra.mxu0 0.0
        %1848 = vmatpush.msra.mxu0 0.0
        %1849 = vmatpush.msra.mxu0 0.0
        %1850 = vmatpush.msra.mxu0 0.0
        %1851 = vmatpush.msra.mxu0 %v1824
        %1852 = vmatpush.msra.mxu0 %v1823
        %1853 = vmatmul.f32.gmra.mxu0 %v1833
        %v1854 = vpop.f32.mrf.mxu0
        %v1855 = vadd.f32 %v1826, %v1854
        %1856 = vmatmul.f32.gmra.mxu0 %v1835
        %v1857 = vpop.f32.mrf.mxu0
        %v1858 = vadd.f32 %v1826, %v1857
        %1859 = vdwg.mxu0
        %v1860 = vmul.f32 %v1855, %v201
        %v1861 = vmul.f32 %v1858, %v202
        %1862 = vrot.lane.b32.xlu0 %v208, 120
        %v1863 = vpop.permute.xlu0 %1862
        %1864 = vrot.lane.b32.xlu0 %v209, 120
        %v1865 = vpop.permute.xlu0 %1864
        %v1868 = vadd.f32 %v1860, %v1863
        %v1869 = vadd.f32 %v1861, %v1865
        %1872 = vrot.lane.b32.xlu0 %v1868, 8
        %v1873 = vpop.permute.xlu0 %1872
        %1874 = vrot.lane.b32.xlu0 %v1869, 8
        %v1875 = vpop.permute.xlu0 %1874
        %v1878 = vsel %vm213, %v1386, %v1873
        %v1879 = vsel %vm213, %v1387, %v1875
        %1880 = vst.msk [vmem:[%s189] sm:$0xff] %vm283, %v1878
        %1881 = vst.msk [vmem:[%s189 + $0x8] sm:$0xff] %vm283, %v1879
        %s1882 = sand.u32 %s84, 1
        %s1883 = scalar_lea.sflag [#allocation6], %s1882
        %s1884 = sand.u32 %s84, 1
        %s1885 = smul.addr %s1884, 16
        %s1886 = scalar_lea.vmem [#allocation9], %s1885
        // Predicated region
        $region37: #{tpu_custom_call.1} parent=27 // pred_check
          %p1887 = pneg %p94
        $region38: #{tpu_custom_call.1} parent=27 // pred_check_branch
          %1889 = sbr.rel (%p1887) target = $region40
        $region39: #{tpu_custom_call.1} parent=27 // pred_region
          %1891 = vsyncadd %s1883, 0
          %s1892 = smul.addr %s29, 2
          %s1893 = smul.addr %s1892, 8
          %s1894 = scalar_lea.hbm %s3, %s1893
          %s1895 = sshll.u32 %s1886, 4
          %s1896 = int_to_ptr.vmem [resolvable:$true] %s1895
          %s1897 = sshll.u32 %s1894, 4
          %s1898 = int_to_ptr.hbm [resolvable:$true] %s1897
          %1903 = dma.vmem_to_hbm [thread:$0]  %s1896, 256, %s1898, %s1883, 128, 128, 8
        $region40: #{tpu_custom_call.1} parent=27 // pred_fallthru
          _
      $region28: #{tpu_custom_call.1} parent=5 // pred_fallthru
        _
      %p1904 = scmp.le.s32.totalorder 2, %s24
      // Predicated region
      $region41: #{tpu_custom_call.1} parent=5 // pred_check
        %p1905 = pneg %p1904
      $region42: #{tpu_custom_call.1} parent=5 // pred_check_branch
        %1907 = sbr.rel (%p1905) target = $region44
      $region43: #{tpu_custom_call.1} parent=5 // pred_region
        %s1908 = ssub.s32 %s24, 2
        // Predicated region
        $region45: #{tpu_custom_call.1} parent=43 // pred_check
          %p1909 = pneg %p100
        $region46: #{tpu_custom_call.1} parent=43 // pred_check_branch
          %1911 = sbr.rel (%p1909) target = $region48
        $region47: #{tpu_custom_call.1} parent=43 // pred_region
          %s1912 = sand.u32 %s85, 1
          %s1913 = scalar_lea.sflag [#allocation6], %s1912
          %s1914 = sand.u32 %s85, 1
          %s1915 = smul.addr %s1914, 16
          %s1916 = scalar_lea.vmem [#allocation9], %s1915
          %1918 = dma.done %s1913, 256
        $region48: #{tpu_custom_call.1} parent=43 // pred_fallthru
          _
      $region44: #{tpu_custom_call.1} parent=5 // pred_fallthru
        _
    $region6: #{tpu_custom_call.1} parent=1 // loop_footer
      %s28 = sadd.s32 1, %s24
    $region7: #{tpu_custom_call.1} parent=1 // loop_footer_branch
      %23 = sbr.rel target = $region3
    $region8: #{tpu_custom_call.1} parent=1 // loop_exit
      _
    %1919 = vsyncpa [#allocation5], 1
    %s1920 = scalar_lea.sflag [#allocation5], 1
    %1921 = vsyncpa %s1920, 1
    %1922 = vsyncpa [#allocation8], 1
    %1923 = vsyncpa [#allocation6], 1
    %s1924 = scalar_lea.sflag [#allocation6], 1
    %1925 = vsyncpa %s1924, 1

</llo_original>
